<compile_context>
chip_gen: v6e
topology: v6e:2x2x1
jax: 0.10.0
libtpu: 0.0.40
codegen_flags: <defaults>
</compile_context>

<pallas_src>
import jax
import jax.numpy as jnp
from jax.experimental import pallas as pl
from jax.experimental.pallas import tpu as pltpu


def _round_up(x, m):
    return (x + m - 1) // m * m


def _gelu(x):
    # tanh-approximate GELU (== jax.nn.gelu approximate=True), f32 path.
    # TODO(synk): torch.nn.functional.gelu defaults to the exact erf form; the
    # tanh approximation (error ~1e-3) is used to stay on guaranteed tanh ops.
    c = jnp.asarray(0.7978845608028654, dtype=x.dtype)  # sqrt(2/pi)
    return 0.5 * x * (1.0 + jnp.tanh(c * (x + 0.044715 * (x * x * x))))


def _feature_kernel(x_ref, ws_ref, bs_ref, we_ref, be_ref, u_ref,
                    wcs_ref, wce_ref, bc_ref,
                    su_ref, ef_ref, ss_ref, es_ref):
    # x_ref : [T, H] f32      ws/we/u : [H, H] bf16 ([in, out] layout)
    # bs/be : [1, H] f32      wcs/wce : [1, H] f32       bc : [1, 1] f32
    # su    : [T, H] bf16 (= start @ U)   ef : [T, H] bf16 (= end)
    # ss    : [T, 1] f32  (= start.wc_s + bc)   es : [T, 1] f32 (= end.wc_e)
    xb = x_ref[...].astype(jnp.bfloat16)
    s = jnp.dot(xb, ws_ref[...], preferred_element_type=jnp.float32) + bs_ref[...]
    e = jnp.dot(xb, we_ref[...], preferred_element_type=jnp.float32) + be_ref[...]
    s = _gelu(s)   # f32 elementwise (safe on v5e's f32-only VPU/EUP)
    e = _gelu(e)
    # TODO(synk): dropout omitted (eval/inference mode); for training add a
    # pltpu.prng_seed / prng_random_bits mask here.
    sb = s.astype(jnp.bfloat16)
    su_ref[...] = jnp.dot(sb, u_ref[...],
                          preferred_element_type=jnp.float32).astype(su_ref.dtype)
    ef_ref[...] = e.astype(ef_ref.dtype)
    ss_ref[...] = jnp.sum(s * wcs_ref[...], axis=1, keepdims=True) + bc_ref[...]
    es_ref[...] = jnp.sum(e * wce_ref[...], axis=1, keepdims=True)


def _span_kernel(su_ref, ef_ref, ss_ref, es_ref, o_ref):
    # su : [TI, H] bf16   ef : [TJ, H] bf16   ss : [TI, 1] f32   es : [1, TJ] f32
    lg = jax.lax.dot_general(
        su_ref[...], ef_ref[...],
        dimension_numbers=(((1,), (1,)), ((), ())),   # (start@U) @ end^T
        preferred_element_type=jnp.float32)
    o_ref[...] = (lg + ss_ref[...] + es_ref[...]).astype(o_ref.dtype)


def span_classifier_fwd(x, params, *, seq_tile=128):
    """x: [B, S, H] float32.  Returns logits [B, S, S] float32."""
    B, S, H = x.shape

    # ---- sequence padding / tile choice ---------------------------------
    if S > seq_tile:
        Sp = _round_up(S, seq_tile)   # lane-dense 128-wide output tiles
        ts = seq_tile
    else:
        Sp = _round_up(S, 8)          # single full-dim block
        ts = Sp
    if Sp != S:
        x = jnp.pad(x, ((0, 0), (0, Sp - S), (0, 0)))

    # ---- parameters: pre-transpose to [in, out], matmul operands in bf16 --
    ws = jnp.transpose(params["w_start"]).astype(jnp.bfloat16)   # [H, H]
    we = jnp.transpose(params["w_end"]).astype(jnp.bfloat16)     # [H, H]
    ub = params["biaffine"].astype(jnp.bfloat16)                 # [H, H]
    bs = params["b_start"].reshape(1, H).astype(jnp.float32)
    be = params["b_end"].reshape(1, H).astype(jnp.float32)
    wcs = params["wc"][:, :H].reshape(1, H).astype(jnp.float32)
    wce = params["wc"][:, H:].reshape(1, H).astype(jnp.float32)
    bc = params["bc"].reshape(1, 1).astype(jnp.float32)

    n_seq = Sp // ts
    const2 = lambda b, t: (0, 0)

    # ---- kernel 1: per-token features ------------------------------------
    feat_fn = pl.pallas_call(
        _feature_kernel,
        out_shape=(
            jax.ShapeDtypeStruct((B, Sp, H), jnp.bfloat16),   # start @ U
            jax.ShapeDtypeStruct((B, Sp, H), jnp.bfloat16),   # end feature
            jax.ShapeDtypeStruct((B, Sp, 1), jnp.float32),    # start score + bc
            jax.ShapeDtypeStruct((B, Sp, 1), jnp.float32),    # end score
        ),
        grid=(B, n_seq),
        in_specs=[
            pl.BlockSpec((None, ts, H), lambda b, t: (b, t, 0)),   # x
            pl.BlockSpec((H, H), const2),                          # Ws^T
            pl.BlockSpec((1, H), const2),                          # bs
            pl.BlockSpec((H, H), const2),                          # We^T
            pl.BlockSpec((1, H), const2),                          # be
            pl.BlockSpec((H, H), const2),                          # U
            pl.BlockSpec((1, H), const2),                          # wc_start
            pl.BlockSpec((1, H), const2),                          # wc_end
            pl.BlockSpec((1, 1), const2),                          # bc
        ],
        out_specs=(
            pl.BlockSpec((None, ts, H), lambda b, t: (b, t, 0)),
            pl.BlockSpec((None, ts, H), lambda b, t: (b, t, 0)),
            pl.BlockSpec((None, ts, 1), lambda b, t: (b, t, 0)),
            pl.BlockSpec((None, ts, 1), lambda b, t: (b, t, 0)),
        ),
        compiler_params=pltpu.CompilerParams(
            dimension_semantics=("parallel", "parallel"),
            vmem_limit_bytes=32 * 1024 * 1024),
        cost_estimate=pl.CostEstimate(
            flops=int(6 * B * Sp * H * H),
            transcendentals=int(2 * B * Sp * H),
            bytes_accessed=int(B * Sp * H * 4 + 3 * H * H * 2
                               + 2 * B * Sp * H * 2 + 2 * B * Sp * 4)),
    )
    su, ef, ss, es = feat_fn(x, ws, bs, we, be, ub, wcs, wce, bc)

    # [B, Sp, 1] -> [B, 1, Sp] is a metadata-only reshape (same linear order).
    es = es.reshape(B, 1, Sp)

    # ---- kernel 2: S x S span logits --------------------------------------
    span_fn = pl.pallas_call(
        _span_kernel,
        out_shape=jax.ShapeDtypeStruct((B, Sp, Sp), jnp.float32),
        grid=(B, n_seq, n_seq),
        in_specs=[
            pl.BlockSpec((None, ts, H), lambda b, i, j: (b, i, 0)),  # start@U
            pl.BlockSpec((None, ts, H), lambda b, i, j: (b, j, 0)),  # end
            pl.BlockSpec((None, ts, 1), lambda b, i, j: (b, i, 0)),  # start score
            pl.BlockSpec((None, 1, ts), lambda b, i, j: (b, 0, j)),  # end score
        ],
        out_specs=pl.BlockSpec((None, ts, ts), lambda b, i, j: (b, i, j)),
        compiler_params=pltpu.CompilerParams(
            dimension_semantics=("parallel", "parallel", "parallel"),
            vmem_limit_bytes=32 * 1024 * 1024),
        cost_estimate=pl.CostEstimate(
            flops=int(2 * B * Sp * Sp * H),
            transcendentals=0,
            bytes_accessed=int(2 * B * Sp * H * 2 + 2 * B * Sp * 4
                               + B * Sp * Sp * 4)),
    )
    logits = span_fn(su, ef, ss, es)
    return logits[:, :S, :S]


def span_classifier_ref(x, params):
    """Plain-JAX reference (same math as the torch forward, eval mode)."""
    H = x.shape[-1]
    s = _gelu(x @ params["w_start"].T + params["b_start"])
    e = _gelu(x @ params["w_end"].T + params["b_end"])
    biaff = jnp.einsum("bih,hk,bjk->bij", s, params["biaffine"], e)
    wc_s = params["wc"][0, :H]
    wc_e = params["wc"][0, H:]
    concat = (s @ wc_s)[:, :, None] + (e @ wc_e)[:, None, :] + params["bc"][0, 0]
    return biaff + concat


def init_params(key, hidden_size):
    """Deterministic init mirroring the torch module (nn.Linear defaults and
    kaiming_uniform_(a=sqrt(5)) for the biaffine parameter)."""
    k1, k2, k3, k4, k5, k6, k7 = jax.random.split(key, 7)
    bh = 1.0 / float(hidden_size) ** 0.5
    b2h = 1.0 / float(2 * hidden_size) ** 0.5
    return {
        "w_start": jax.random.uniform(k1, (hidden_size, hidden_size), jnp.float32, -bh, bh),
        "b_start": jax.random.uniform(k2, (hidden_size,), jnp.float32, -bh, bh),
        "w_end":   jax.random.uniform(k3, (hidden_size, hidden_size), jnp.float32, -bh, bh),
        "b_end":   jax.random.uniform(k4, (hidden_size,), jnp.float32, -bh, bh),
        "biaffine": jax.random.uniform(k5, (hidden_size, hidden_size), jnp.float32, -bh, bh),
        "wc": jax.random.uniform(k6, (1, 2 * hidden_size), jnp.float32, -b2h, b2h),
        "bc": jax.random.uniform(k7, (1, 1), jnp.float32, -b2h, b2h),
    }


if __name__ == "__main__":
    batch, seq, hidden = 2, 8, 32   # dropout_rate unused at inference

    key = jax.random.PRNGKey(0)
    kx, kp = jax.random.split(key)
    x = jax.random.normal(kx, (batch, seq, hidden), jnp.float32)
    params = init_params(kp, hidden)

    out = jax.jit(span_classifier_fwd)(x, params)
    out = jax.block_until_ready(out)

    ref = span_classifier_ref(x, params)
    assert out.shape == (batch, seq, seq)
    max_err = float(jnp.max(jnp.abs(out - ref)))
    # bf16 MXU operands with f32 accumulation -> loosened tolerance vs f32 ref.
    assert max_err < 1e-1, f"max abs error {max_err}"

    print("KERNEL_OK")
</pallas_src>

<mosaic_0001>
module attributes {stable_mosaic.version = 11 : i64} {
  func.func @_feature_kernel(%arg0: i32, %arg1: i32, %arg2: memref<1x8x32xf32, #tpu.memory_space<vmem>>, %arg3: memref<32x32xbf16, #tpu.memory_space<vmem>>, %arg4: memref<1x32xf32, #tpu.memory_space<vmem>>, %arg5: memref<32x32xbf16, #tpu.memory_space<vmem>>, %arg6: memref<1x32xf32, #tpu.memory_space<vmem>>, %arg7: memref<32x32xbf16, #tpu.memory_space<vmem>>, %arg8: memref<1x32xf32, #tpu.memory_space<vmem>>, %arg9: memref<1x32xf32, #tpu.memory_space<vmem>>, %arg10: memref<1x1xf32, #tpu.memory_space<vmem>>, %arg11: memref<1x8x32xbf16, #tpu.memory_space<vmem>>, %arg12: memref<1x8x32xbf16, #tpu.memory_space<vmem>>, %arg13: memref<1x8x1xf32, #tpu.memory_space<vmem>>, %arg14: memref<1x8x1xf32, #tpu.memory_space<vmem>>) attributes {dimension_semantics = [#tpu.dimension_semantics<parallel>, #tpu.dimension_semantics<parallel>], iteration_bounds = array<i64: 2, 1>, scalar_prefetch = 0 : i64, scratch_operands = 0 : i64, tpu.core_type = #tpu.core_type<tc>, window_params = [{transform_indices = @transform_0, window_bounds = array<i64: 1, 8, 32>}, {pipeline_mode = #tpu.pipeline_mode<synchronous>, transform_indices = @transform_1, window_bounds = array<i64: 32, 32>}, {pipeline_mode = #tpu.pipeline_mode<synchronous>, transform_indices = @transform_2, window_bounds = array<i64: 1, 32>}, {pipeline_mode = #tpu.pipeline_mode<synchronous>, transform_indices = @transform_3, window_bounds = array<i64: 32, 32>}, {pipeline_mode = #tpu.pipeline_mode<synchronous>, transform_indices = @transform_4, window_bounds = array<i64: 1, 32>}, {pipeline_mode = #tpu.pipeline_mode<synchronous>, transform_indices = @transform_5, window_bounds = array<i64: 32, 32>}, {pipeline_mode = #tpu.pipeline_mode<synchronous>, transform_indices = @transform_6, window_bounds = array<i64: 1, 32>}, {pipeline_mode = #tpu.pipeline_mode<synchronous>, transform_indices = @transform_7, window_bounds = array<i64: 1, 32>}, {pipeline_mode = #tpu.pipeline_mode<synchronous>, transform_indices = @transform_8, window_bounds = array<i64: 1, 1>}, {transform_indices = @transform_9, window_bounds = array<i64: 1, 8, 32>}, {transform_indices = @transform_10, window_bounds = array<i64: 1, 8, 32>}, {transform_indices = @transform_11, window_bounds = array<i64: 1, 8, 1>}, {transform_indices = @transform_12, window_bounds = array<i64: 1, 8, 1>}]} {
    %c0 = arith.constant 0 : index
    %c0_0 = arith.constant 0 : index
    %c0_1 = arith.constant 0 : index
    %0 = vector.load %arg2[%c0, %c0_0, %c0_1] : memref<1x8x32xf32, #tpu.memory_space<vmem>>, vector<1x8x32xf32>
    %1 = vector.shape_cast %0 : vector<1x8x32xf32> to vector<8x32xf32>
    %2 = arith.truncf %1 : vector<8x32xf32> to vector<8x32xbf16>
    %c0_2 = arith.constant 0 : index
    %c0_3 = arith.constant 0 : index
    %3 = vector.load %arg3[%c0_2, %c0_3] : memref<32x32xbf16, #tpu.memory_space<vmem>>, vector<32x32xbf16>
    %cst = arith.constant dense<0.000000e+00> : vector<8x32xf32>
    %4 = tpu.matmul %2, %3, %cst {dimension_numbers = #tpu.dot_dimension_numbers<[1], [0], [0], [1], [0, 0, 1, 1], [], []>} : vector<8x32xbf16>, vector<32x32xbf16>, vector<8x32xf32> -> vector<8x32xf32>
    %c0_4 = arith.constant 0 : index
    %c0_5 = arith.constant 0 : index
    %5 = vector.load %arg4[%c0_4, %c0_5] : memref<1x32xf32, #tpu.memory_space<vmem>>, vector<1x32xf32>
    %6 = vector.broadcast %5 : vector<1x32xf32> to vector<8x32xf32>
    %7 = arith.addf %4, %6 : vector<8x32xf32>
    %c0_6 = arith.constant 0 : index
    %c0_7 = arith.constant 0 : index
    %8 = vector.load %arg5[%c0_6, %c0_7] : memref<32x32xbf16, #tpu.memory_space<vmem>>, vector<32x32xbf16>
    %cst_8 = arith.constant dense<0.000000e+00> : vector<8x32xf32>
    %9 = tpu.matmul %2, %8, %cst_8 {dimension_numbers = #tpu.dot_dimension_numbers<[1], [0], [0], [1], [0, 0, 1, 1], [], []>} : vector<8x32xbf16>, vector<32x32xbf16>, vector<8x32xf32> -> vector<8x32xf32>
    %c0_9 = arith.constant 0 : index
    %c0_10 = arith.constant 0 : index
    %10 = vector.load %arg6[%c0_9, %c0_10] : memref<1x32xf32, #tpu.memory_space<vmem>>, vector<1x32xf32>
    %11 = vector.broadcast %10 : vector<1x32xf32> to vector<8x32xf32>
    %12 = arith.addf %9, %11 : vector<8x32xf32>
    %cst_11 = arith.constant 5.000000e-01 : f32
    %13 = vector.broadcast %cst_11 : f32 to vector<8x32xf32>
    %14 = arith.mulf %13, %7 : vector<8x32xf32>
    %15 = arith.mulf %7, %7 : vector<8x32xf32>
    %16 = arith.mulf %15, %7 : vector<8x32xf32>
    %cst_12 = arith.constant 4.471500e-02 : f32
    %17 = vector.broadcast %cst_12 : f32 to vector<8x32xf32>
    %18 = arith.mulf %17, %16 : vector<8x32xf32>
    %19 = arith.addf %7, %18 : vector<8x32xf32>
    %cst_13 = arith.constant 0.797884583 : f32
    %20 = vector.broadcast %cst_13 : f32 to vector<8x32xf32>
    %21 = arith.mulf %20, %19 : vector<8x32xf32>
    %22 = math.tanh %21 : vector<8x32xf32>
    %cst_14 = arith.constant 1.000000e+00 : f32
    %23 = vector.broadcast %cst_14 : f32 to vector<8x32xf32>
    %24 = arith.addf %23, %22 : vector<8x32xf32>
    %25 = arith.mulf %14, %24 : vector<8x32xf32>
    %cst_15 = arith.constant 5.000000e-01 : f32
    %26 = vector.broadcast %cst_15 : f32 to vector<8x32xf32>
    %27 = arith.mulf %26, %12 : vector<8x32xf32>
    %28 = arith.mulf %12, %12 : vector<8x32xf32>
    %29 = arith.mulf %28, %12 : vector<8x32xf32>
    %cst_16 = arith.constant 4.471500e-02 : f32
    %30 = vector.broadcast %cst_16 : f32 to vector<8x32xf32>
    %31 = arith.mulf %30, %29 : vector<8x32xf32>
    %32 = arith.addf %12, %31 : vector<8x32xf32>
    %cst_17 = arith.constant 0.797884583 : f32
    %33 = vector.broadcast %cst_17 : f32 to vector<8x32xf32>
    %34 = arith.mulf %33, %32 : vector<8x32xf32>
    %35 = math.tanh %34 : vector<8x32xf32>
    %cst_18 = arith.constant 1.000000e+00 : f32
    %36 = vector.broadcast %cst_18 : f32 to vector<8x32xf32>
    %37 = arith.addf %36, %35 : vector<8x32xf32>
    %38 = arith.mulf %27, %37 : vector<8x32xf32>
    %39 = arith.truncf %25 : vector<8x32xf32> to vector<8x32xbf16>
    %c0_19 = arith.constant 0 : index
    %c0_20 = arith.constant 0 : index
    %40 = vector.load %arg7[%c0_19, %c0_20] : memref<32x32xbf16, #tpu.memory_space<vmem>>, vector<32x32xbf16>
    %cst_21 = arith.constant dense<0.000000e+00> : vector<8x32xf32>
    %41 = tpu.matmul %39, %40, %cst_21 {dimension_numbers = #tpu.dot_dimension_numbers<[1], [0], [0], [1], [0, 0, 1, 1], [], []>} : vector<8x32xbf16>, vector<32x32xbf16>, vector<8x32xf32> -> vector<8x32xf32>
    %42 = arith.truncf %41 : vector<8x32xf32> to vector<8x32xbf16>
    %c0_22 = arith.constant 0 : index
    %c0_23 = arith.constant 0 : index
    %c0_24 = arith.constant 0 : index
    %43 = vector.load %arg11[%c0_22, %c0_23, %c0_24] : memref<1x8x32xbf16, #tpu.memory_space<vmem>>, vector<1x8x32xbf16>
    %44 = vector.shape_cast %43 : vector<1x8x32xbf16> to vector<8x32xbf16>
    %45 = vector.shape_cast %42 : vector<8x32xbf16> to vector<1x8x32xbf16>
    tpu.vector_store %arg11[%c0_22, %c0_23, %c0_24], %45 {strides = array<i32>} : memref<1x8x32xbf16, #tpu.memory_space<vmem>>, vector<1x8x32xbf16>,
    %46 = arith.truncf %38 : vector<8x32xf32> to vector<8x32xbf16>
    %c0_25 = arith.constant 0 : index
    %c0_26 = arith.constant 0 : index
    %c0_27 = arith.constant 0 : index
    %47 = vector.load %arg12[%c0_25, %c0_26, %c0_27] : memref<1x8x32xbf16, #tpu.memory_space<vmem>>, vector<1x8x32xbf16>
    %48 = vector.shape_cast %47 : vector<1x8x32xbf16> to vector<8x32xbf16>
    %49 = vector.shape_cast %46 : vector<8x32xbf16> to vector<1x8x32xbf16>
    tpu.vector_store %arg12[%c0_25, %c0_26, %c0_27], %49 {strides = array<i32>} : memref<1x8x32xbf16, #tpu.memory_space<vmem>>, vector<1x8x32xbf16>,
    %c0_28 = arith.constant 0 : index
    %c0_29 = arith.constant 0 : index
    %50 = vector.load %arg8[%c0_28, %c0_29] : memref<1x32xf32, #tpu.memory_space<vmem>>, vector<1x32xf32>
    %51 = vector.broadcast %50 : vector<1x32xf32> to vector<8x32xf32>
    %52 = arith.mulf %25, %51 : vector<8x32xf32>
    %cst_30 = arith.constant dense<0.000000e+00> : vector<8xf32>
    %53 = vector.multi_reduction <add>, %52, %cst_30 [1] : vector<8x32xf32> to vector<8xf32>
    %54 = vector.shape_cast %53 : vector<8xf32> to vector<8x1xf32>
    %c0_31 = arith.constant 0 : index
    %c0_32 = arith.constant 0 : index
    %55 = vector.load %arg10[%c0_31, %c0_32] : memref<1x1xf32, #tpu.memory_space<vmem>>, vector<1x1xf32>
    %56 = vector.broadcast %55 : vector<1x1xf32> to vector<8x1xf32>
    %57 = arith.addf %54, %56 : vector<8x1xf32>
    %c0_33 = arith.constant 0 : index
    %c0_34 = arith.constant 0 : index
    %c0_35 = arith.constant 0 : index
    %58 = vector.load %arg13[%c0_33, %c0_34, %c0_35] : memref<1x8x1xf32, #tpu.memory_space<vmem>>, vector<1x8x1xf32>
    %59 = vector.shape_cast %58 : vector<1x8x1xf32> to vector<8x1xf32>
    %60 = vector.shape_cast %57 : vector<8x1xf32> to vector<1x8x1xf32>
    tpu.vector_store %arg13[%c0_33, %c0_34, %c0_35], %60 {strides = array<i32>} : memref<1x8x1xf32, #tpu.memory_space<vmem>>, vector<1x8x1xf32>,
    %c0_36 = arith.constant 0 : index
    %c0_37 = arith.constant 0 : index
    %61 = vector.load %arg9[%c0_36, %c0_37] : memref<1x32xf32, #tpu.memory_space<vmem>>, vector<1x32xf32>
    %62 = vector.broadcast %61 : vector<1x32xf32> to vector<8x32xf32>
    %63 = arith.mulf %38, %62 : vector<8x32xf32>
    %cst_38 = arith.constant dense<0.000000e+00> : vector<8xf32>
    %64 = vector.multi_reduction <add>, %63, %cst_38 [1] : vector<8x32xf32> to vector<8xf32>
    %65 = vector.shape_cast %64 : vector<8xf32> to vector<8x1xf32>
    %c0_39 = arith.constant 0 : index
    %c0_40 = arith.constant 0 : index
    %c0_41 = arith.constant 0 : index
    %66 = vector.load %arg14[%c0_39, %c0_40, %c0_41] : memref<1x8x1xf32, #tpu.memory_space<vmem>>, vector<1x8x1xf32>
    %67 = vector.shape_cast %66 : vector<1x8x1xf32> to vector<8x1xf32>
    %68 = vector.shape_cast %65 : vector<8x1xf32> to vector<1x8x1xf32>
    tpu.vector_store %arg14[%c0_39, %c0_40, %c0_41], %68 {strides = array<i32>} : memref<1x8x1xf32, #tpu.memory_space<vmem>>, vector<1x8x1xf32>,
    return
  }
  func.func @transform_0(%arg0: i32, %arg1: i32) -> (i32, i32, i32) {
    %c0_i32 = arith.constant 0 : i32
    %c0_i32_0 = arith.constant 0 : i32
    return %arg0, %arg1, %c0_i32 : i32, i32, i32
  }
  func.func @transform_1(%arg0: i32, %arg1: i32) -> (i32, i32) {
    %c0_i32 = arith.constant 0 : i32
    %c0_i32_0 = arith.constant 0 : i32
    %c0_i32_1 = arith.constant 0 : i32
    return %c0_i32, %c0_i32_0 : i32, i32
  }
  func.func @transform_2(%arg0: i32, %arg1: i32) -> (i32, i32) {
    %c0_i32 = arith.constant 0 : i32
    %c0_i32_0 = arith.constant 0 : i32
    %c0_i32_1 = arith.constant 0 : i32
    return %c0_i32, %c0_i32_0 : i32, i32
  }
  func.func @transform_3(%arg0: i32, %arg1: i32) -> (i32, i32) {
    %c0_i32 = arith.constant 0 : i32
    %c0_i32_0 = arith.constant 0 : i32
    %c0_i32_1 = arith.constant 0 : i32
    return %c0_i32, %c0_i32_0 : i32, i32
  }
  func.func @transform_4(%arg0: i32, %arg1: i32) -> (i32, i32) {
    %c0_i32 = arith.constant 0 : i32
    %c0_i32_0 = arith.constant 0 : i32
    %c0_i32_1 = arith.constant 0 : i32
    return %c0_i32, %c0_i32_0 : i32, i32
  }
  func.func @transform_5(%arg0: i32, %arg1: i32) -> (i32, i32) {
    %c0_i32 = arith.constant 0 : i32
    %c0_i32_0 = arith.constant 0 : i32
    %c0_i32_1 = arith.constant 0 : i32
    return %c0_i32, %c0_i32_0 : i32, i32
  }
  func.func @transform_6(%arg0: i32, %arg1: i32) -> (i32, i32) {
    %c0_i32 = arith.constant 0 : i32
    %c0_i32_0 = arith.constant 0 : i32
    %c0_i32_1 = arith.constant 0 : i32
    return %c0_i32, %c0_i32_0 : i32, i32
  }
  func.func @transform_7(%arg0: i32, %arg1: i32) -> (i32, i32) {
    %c0_i32 = arith.constant 0 : i32
    %c0_i32_0 = arith.constant 0 : i32
    %c0_i32_1 = arith.constant 0 : i32
    return %c0_i32, %c0_i32_0 : i32, i32
  }
  func.func @transform_8(%arg0: i32, %arg1: i32) -> (i32, i32) {
    %c0_i32 = arith.constant 0 : i32
    %c0_i32_0 = arith.constant 0 : i32
    %c0_i32_1 = arith.constant 0 : i32
    return %c0_i32, %c0_i32_0 : i32, i32
  }
  func.func @transform_9(%arg0: i32, %arg1: i32) -> (i32, i32, i32) {
    %c0_i32 = arith.constant 0 : i32
    %c0_i32_0 = arith.constant 0 : i32
    return %arg0, %arg1, %c0_i32 : i32, i32, i32
  }
  func.func @transform_10(%arg0: i32, %arg1: i32) -> (i32, i32, i32) {
    %c0_i32 = arith.constant 0 : i32
    %c0_i32_0 = arith.constant 0 : i32
    return %arg0, %arg1, %c0_i32 : i32, i32, i32
  }
  func.func @transform_11(%arg0: i32, %arg1: i32) -> (i32, i32, i32) {
    %c0_i32 = arith.constant 0 : i32
    %c0_i32_0 = arith.constant 0 : i32
    return %arg0, %arg1, %c0_i32 : i32, i32, i32
  }
  func.func @transform_12(%arg0: i32, %arg1: i32) -> (i32, i32, i32) {
    %c0_i32 = arith.constant 0 : i32
    %c0_i32_0 = arith.constant 0 : i32
    return %arg0, %arg1, %c0_i32 : i32, i32, i32
  }
}

module attributes {stable_mosaic.version = 11 : i64} {
  func.func @_span_kernel(%arg0: i32, %arg1: i32, %arg2: i32, %arg3: memref<1x8x32xbf16, #tpu.memory_space<vmem>>, %arg4: memref<1x8x32xbf16, #tpu.memory_space<vmem>>, %arg5: memref<1x8x1xf32, #tpu.memory_space<vmem>>, %arg6: memref<1x1x8xf32, #tpu.memory_space<vmem>>, %arg7: memref<1x8x8xf32, #tpu.memory_space<vmem>>) attributes {dimension_semantics = [#tpu.dimension_semantics<parallel>, #tpu.dimension_semantics<parallel>, #tpu.dimension_semantics<parallel>], iteration_bounds = array<i64: 2, 1, 1>, scalar_prefetch = 0 : i64, scratch_operands = 0 : i64, tpu.core_type = #tpu.core_type<tc>, window_params = [{transform_indices = @transform_0, window_bounds = array<i64: 1, 8, 32>}, {transform_indices = @transform_1, window_bounds = array<i64: 1, 8, 32>}, {transform_indices = @transform_2, window_bounds = array<i64: 1, 8, 1>}, {transform_indices = @transform_3, window_bounds = array<i64: 1, 1, 8>}, {transform_indices = @transform_4, window_bounds = array<i64: 1, 8, 8>}]} {
    %c0 = arith.constant 0 : index
    %c0_0 = arith.constant 0 : index
    %c0_1 = arith.constant 0 : index
    %0 = vector.load %arg3[%c0, %c0_0, %c0_1] : memref<1x8x32xbf16, #tpu.memory_space<vmem>>, vector<1x8x32xbf16>
    %1 = vector.shape_cast %0 : vector<1x8x32xbf16> to vector<8x32xbf16>
    %c0_2 = arith.constant 0 : index
    %c0_3 = arith.constant 0 : index
    %c0_4 = arith.constant 0 : index
    %2 = vector.load %arg4[%c0_2, %c0_3, %c0_4] : memref<1x8x32xbf16, #tpu.memory_space<vmem>>, vector<1x8x32xbf16>
    %3 = vector.shape_cast %2 : vector<1x8x32xbf16> to vector<8x32xbf16>
    %cst = arith.constant dense<0.000000e+00> : vector<8x8xf32>
    %4 = tpu.matmul %1, %3, %cst {dimension_numbers = #tpu.dot_dimension_numbers<[1], [1], [0], [0], [0, 0, 1, 0], [], []>} : vector<8x32xbf16>, vector<8x32xbf16>, vector<8x8xf32> -> vector<8x8xf32>
    %c0_5 = arith.constant 0 : index
    %c0_6 = arith.constant 0 : index
    %c0_7 = arith.constant 0 : index
    %5 = vector.load %arg5[%c0_5, %c0_6, %c0_7] : memref<1x8x1xf32, #tpu.memory_space<vmem>>, vector<1x8x1xf32>
    %6 = vector.shape_cast %5 : vector<1x8x1xf32> to vector<8x1xf32>
    %7 = vector.broadcast %6 : vector<8x1xf32> to vector<8x8xf32>
    %8 = arith.addf %4, %7 : vector<8x8xf32>
    %c0_8 = arith.constant 0 : index
    %c0_9 = arith.constant 0 : index
    %c0_10 = arith.constant 0 : index
    %9 = vector.load %arg6[%c0_8, %c0_9, %c0_10] : memref<1x1x8xf32, #tpu.memory_space<vmem>>, vector<1x1x8xf32>
    %10 = vector.shape_cast %9 : vector<1x1x8xf32> to vector<1x8xf32>
    %11 = vector.broadcast %10 : vector<1x8xf32> to vector<8x8xf32>
    %12 = arith.addf %8, %11 : vector<8x8xf32>
    %c0_11 = arith.constant 0 : index
    %c0_12 = arith.constant 0 : index
    %c0_13 = arith.constant 0 : index
    %13 = vector.load %arg7[%c0_11, %c0_12, %c0_13] : memref<1x8x8xf32, #tpu.memory_space<vmem>>, vector<1x8x8xf32>
    %14 = vector.shape_cast %13 : vector<1x8x8xf32> to vector<8x8xf32>
    %15 = vector.shape_cast %12 : vector<8x8xf32> to vector<1x8x8xf32>
    tpu.vector_store %arg7[%c0_11, %c0_12, %c0_13], %15 {strides = array<i32>} : memref<1x8x8xf32, #tpu.memory_space<vmem>>, vector<1x8x8xf32>,
    return
  }
  func.func @transform_0(%arg0: i32, %arg1: i32, %arg2: i32) -> (i32, i32, i32) {
    %c0_i32 = arith.constant 0 : i32
    %c0_i32_0 = arith.constant 0 : i32
    return %arg0, %arg1, %c0_i32 : i32, i32, i32
  }
  func.func @transform_1(%arg0: i32, %arg1: i32, %arg2: i32) -> (i32, i32, i32) {
    %c0_i32 = arith.constant 0 : i32
    %c0_i32_0 = arith.constant 0 : i32
    return %arg0, %arg2, %c0_i32 : i32, i32, i32
  }
  func.func @transform_2(%arg0: i32, %arg1: i32, %arg2: i32) -> (i32, i32, i32) {
    %c0_i32 = arith.constant 0 : i32
    %c0_i32_0 = arith.constant 0 : i32
    return %arg0, %arg1, %c0_i32 : i32, i32, i32
  }
  func.func @transform_3(%arg0: i32, %arg1: i32, %arg2: i32) -> (i32, i32, i32) {
    %c0_i32 = arith.constant 0 : i32
    %c0_i32_0 = arith.constant 0 : i32
    return %arg0, %c0_i32, %arg2 : i32, i32, i32
  }
  func.func @transform_4(%arg0: i32, %arg1: i32, %arg2: i32) -> (i32, i32, i32) {
    %c0_i32 = arith.constant 0 : i32
    return %arg0, %arg1, %arg2 : i32, i32, i32
  }
}

</mosaic_0001>

<llo_original>
// kernel: span_classifier_fwd.3
$region0: #{span_classifier_fwd.3}
  #allocation0 [shape = 'u32[]', space=smem, size = 0x4, offset = 0x4, fixed_abs, tag = 'smem constant byte address 0x4 - core index']
  #allocation1 [shape = 'u32[144,128]{1,0:T(1,128)}', space=vmem, size = 0x12000, scoped, tag = 'internal scratch']
  %s0 = inlined_call_operand.vmem [shape: bf16[2,8,32], index: 0, kind: input, shape index: {}]
  %s1 = inlined_call_operand.vmem [shape: bf16[2,8,32], index: 1, kind: input, shape index: {}]
  %s2 = inlined_call_operand.vmem [shape: f32[2,8,1], index: 2, kind: input, shape index: {}]
  %s3 = inlined_call_operand.vmem [shape: f32[2,1,8], index: 3, kind: input, shape index: {}]
  %s4 = inlined_call_operand.hbm [shape: f32[2,8,8], index: 4, kind: output, shape index: {}]
  %s5 = sld [smem:[#allocation0]]
  $region49: #{span_classifier_fwd.3} parent=0
    _
  %s7 = ssub.s32 1, %s5
  %s8 = scalar_select 0, %s7, %s5
  $region1: #{span_classifier_fwd.3} parent=0
    #allocation2 [shape = 'u8[8192]{0}', space=vmem, size = 0x2000, scoped, tag = 'output window, operand 0']
    #allocation3 [shape = 's32[2]{0}', space=sflag, size = 0x8, scoped, tag = 'scoped memory for span_classifier_fwd.3']
    %9 = vsyncpa [#allocation3], 0
    %s10 = scalar_lea.sflag [#allocation3], 1
    %11 = vsyncpa %s10, 0
    loop: start=0, step=1, limit=4
    $region2: #{span_classifier_fwd.3} parent=1 // loop_pre_header
      _
    $region3: #{span_classifier_fwd.3} parent=1 // loop_header
      %s13 = sphi 0, %s17
      %p14 = scmp.ge.s32.totalorder %s13, 4
      %s20 = sphi 0, %s39
      %s21 = sphi 0, %s35
      %s22 = sphi 0, %s31
      %s23 = sphi 0, %s20
      %s24 = sphi 0, %s21
      %s25 = sphi 0, %s22
      %s26 = sphi 0, %s23
      %s27 = sphi 0, %s24
      %s28 = sphi 0, %s25
      %s44 = sphi 0, %s46
      %s47 = sphi 0, %s44
      %s48 = sphi 0, %s47
      %s64 = sphi 0, %s48
      %s72 = sphi 0, %s74
      %s75 = sphi 0, %s72
      %s76 = sphi 0, %s75
      %s92 = sphi 0, %s76
      %s100 = sphi 0, %s102
      %s103 = sphi 0, %s100
      %s104 = sphi 0, %s103
      %s120 = sphi 0, %s104
      %s128 = sphi 0, %s130
      %s131 = sphi 0, %s128
      %s132 = sphi 0, %s131
      %s148 = sphi 0, %s132
      %s158 = sphi 0, %s160
      %s161 = sphi 0, %s158
      %s162 = sphi 0, %s161
      %s178 = sphi 0, %s162
    $region4: #{span_classifier_fwd.3} parent=1 // loop_header_branch
      %16 = sbr.rel (%p14) target = $region8
    $region5: #{span_classifier_fwd.3} parent=1 // loop_body
      %s18 = ssub.s32 %s13, 1
      %s19 = ssub.s32 %s13, 2
      %s29 = sadd.s32 1, %s22
      %p30 = scmp.ge.s32.totalorder %s29, 1
      %s31 = scalar_select %p30, 0, %s29
      %s32 = sadd.s32 1, %s21
      %s33 = scalar_select %p30, %s32, %s21
      %p34 = scmp.ge.s32.totalorder %s33, 1
      %s35 = scalar_select %p34, 0, %s33
      %s36 = sadd.s32 1, %s20
      %s37 = scalar_select %p34, %s36, %s20
      %p38 = scmp.ge.s32.totalorder %s37, 2
      %s39 = scalar_select %p38, 0, %s37
      %s40 = ssub.s32 %s20, %s39
      %s41 = ssub.s32 %s21, %s35
      %s42 = sor.u32 %s40, %s41
      %p43 = scmp.eq.s32.totalorder %s42, 0
      %s45 = sadd.s32 %s44, 1
      %s46 = scalar_select %p43, %s44, %s45
      %p49 = pneg %p43
      %p50 = scmp.eq.s32.totalorder %s13, 1
      %p51 = por %p49, %p50
      %p52 = scmp.ne.s32.totalorder %s44, %s47
      %p53 = scmp.eq.s32.totalorder %s13, 0
      %p54 = por %p52, %p53
      %p55 = scmp.ne.s32.totalorder %s44, %s47
      %p56 = scmp.eq.s32.totalorder %s18, 1
      %p57 = por %p55, %p56
      %p58 = scmp.ne.s32.totalorder %s47, %s48
      %p59 = scmp.eq.s32.totalorder %s18, 0
      %p60 = por %p58, %p59
      %p61 = scmp.ne.s32.totalorder %s47, %s48
      %p62 = scmp.eq.s32.totalorder %s19, 1
      %p63 = por %p61, %p62
      %p65 = scmp.ne.s32.totalorder %s48, %s64
      %p66 = scmp.eq.s32.totalorder %s19, 0
      %p67 = por %p65, %p66
      %s68 = ssub.s32 %s20, %s39
      %s69 = ssub.s32 %s22, %s31
      %s70 = sor.u32 %s68, %s69
      %p71 = scmp.eq.s32.totalorder %s70, 0
      %s73 = sadd.s32 %s72, 1
      %s74 = scalar_select %p71, %s72, %s73
      %p77 = pneg %p71
      %p78 = scmp.eq.s32.totalorder %s13, 1
      %p79 = por %p77, %p78
      %p80 = scmp.ne.s32.totalorder %s72, %s75
      %p81 = scmp.eq.s32.totalorder %s13, 0
      %p82 = por %p80, %p81
      %p83 = scmp.ne.s32.totalorder %s72, %s75
      %p84 = scmp.eq.s32.totalorder %s18, 1
      %p85 = por %p83, %p84
      %p86 = scmp.ne.s32.totalorder %s75, %s76
      %p87 = scmp.eq.s32.totalorder %s18, 0
      %p88 = por %p86, %p87
      %p89 = scmp.ne.s32.totalorder %s75, %s76
      %p90 = scmp.eq.s32.totalorder %s19, 1
      %p91 = por %p89, %p90
      %p93 = scmp.ne.s32.totalorder %s76, %s92
      %p94 = scmp.eq.s32.totalorder %s19, 0
      %p95 = por %p93, %p94
      %s96 = ssub.s32 %s20, %s39
      %s97 = ssub.s32 %s21, %s35
      %s98 = sor.u32 %s96, %s97
      %p99 = scmp.eq.s32.totalorder %s98, 0
      %s101 = sadd.s32 %s100, 1
      %s102 = scalar_select %p99, %s100, %s101
      %p105 = pneg %p99
      %p106 = scmp.eq.s32.totalorder %s13, 1
      %p107 = por %p105, %p106
      %p108 = scmp.ne.s32.totalorder %s100, %s103
      %p109 = scmp.eq.s32.totalorder %s13, 0
      %p110 = por %p108, %p109
      %p111 = scmp.ne.s32.totalorder %s100, %s103
      %p112 = scmp.eq.s32.totalorder %s18, 1
      %p113 = por %p111, %p112
      %p114 = scmp.ne.s32.totalorder %s103, %s104
      %p115 = scmp.eq.s32.totalorder %s18, 0
      %p116 = por %p114, %p115
      %p117 = scmp.ne.s32.totalorder %s103, %s104
      %p118 = scmp.eq.s32.totalorder %s19, 1
      %p119 = por %p117, %p118
      %p121 = scmp.ne.s32.totalorder %s104, %s120
      %p122 = scmp.eq.s32.totalorder %s19, 0
      %p123 = por %p121, %p122
      %s124 = ssub.s32 %s20, %s39
      %s125 = ssub.s32 %s22, %s31
      %s126 = sor.u32 %s124, %s125
      %p127 = scmp.eq.s32.totalorder %s126, 0
      %s129 = sadd.s32 %s128, 1
      %s130 = scalar_select %p127, %s128, %s129
      %p133 = pneg %p127
      %p134 = scmp.eq.s32.totalorder %s13, 1
      %p135 = por %p133, %p134
      %p136 = scmp.ne.s32.totalorder %s128, %s131
      %p137 = scmp.eq.s32.totalorder %s13, 0
      %p138 = por %p136, %p137
      %p139 = scmp.ne.s32.totalorder %s128, %s131
      %p140 = scmp.eq.s32.totalorder %s18, 1
      %p141 = por %p139, %p140
      %p142 = scmp.ne.s32.totalorder %s131, %s132
      %p143 = scmp.eq.s32.totalorder %s18, 0
      %p144 = por %p142, %p143
      %p145 = scmp.ne.s32.totalorder %s131, %s132
      %p146 = scmp.eq.s32.totalorder %s19, 1
      %p147 = por %p145, %p146
      %p149 = scmp.ne.s32.totalorder %s132, %s148
      %p150 = scmp.eq.s32.totalorder %s19, 0
      %p151 = por %p149, %p150
      %s152 = ssub.s32 %s20, %s39
      %s153 = ssub.s32 %s21, %s35
      %s154 = sor.u32 %s152, %s153
      %s155 = ssub.s32 %s22, %s31
      %s156 = sor.u32 %s154, %s155
      %p157 = scmp.eq.s32.totalorder %s156, 0
      %s159 = sadd.s32 %s158, 1
      %s160 = scalar_select %p157, %s158, %s159
      %p163 = pneg %p157
      %p164 = scmp.eq.s32.totalorder %s13, 1
      %p165 = por %p163, %p164
      %p166 = scmp.ne.s32.totalorder %s158, %s161
      %p167 = scmp.eq.s32.totalorder %s13, 0
      %p168 = por %p166, %p167
      %p169 = scmp.ne.s32.totalorder %s158, %s161
      %p170 = scmp.eq.s32.totalorder %s18, 1
      %p171 = por %p169, %p170
      %p172 = scmp.ne.s32.totalorder %s161, %s162
      %p173 = scmp.eq.s32.totalorder %s18, 0
      %p174 = por %p172, %p173
      %p175 = scmp.ne.s32.totalorder %s161, %s162
      %p176 = scmp.eq.s32.totalorder %s19, 1
      %p177 = por %p175, %p176
      %p179 = scmp.ne.s32.totalorder %s162, %s178
      %p180 = scmp.eq.s32.totalorder %s19, 0
      %p181 = por %p179, %p180
      %p182 = scmp.le.s32.totalorder 1, %s13
      %p183 = scmp.lt.s32.totalorder %s13, 3
      %p184 = pnand %p182, %p183
      %p185 = pneg %p184
      // Predicated region
      $region9: #{span_classifier_fwd.3} parent=5 // pred_check
        _
      $region10: #{span_classifier_fwd.3} parent=5 // pred_check_branch
        %187 = sbr.rel (%p184) target = $region12
      $region11: #{span_classifier_fwd.3} parent=5 // pred_region
        %s188 = ssub.s32 %s13, 1
      $region12: #{span_classifier_fwd.3} parent=5 // pred_fallthru
        _
      %p189 = scmp.lt.s32.totalorder %s13, 2
      // Predicated region
      $region13: #{span_classifier_fwd.3} parent=5 // pred_check
        %p190 = pneg %p189
      $region14: #{span_classifier_fwd.3} parent=5 // pred_check_branch
        %192 = sbr.rel (%p190) target = $region16
      $region15: #{span_classifier_fwd.3} parent=5 // pred_region
        // Predicated region
        $region17: #{span_classifier_fwd.3} parent=15 // pred_check
          %p193 = pneg %p54
        $region18: #{span_classifier_fwd.3} parent=15 // pred_check_branch
          %195 = sbr.rel (%p193) target = $region20
        $region19: #{span_classifier_fwd.3} parent=15 // pred_region
          %p196 = scmp.lt.s32.totalorder %s20, 1
          %s197 = scalar_select %p196, %s20, 1
          %p198 = scmp.lt.s32.totalorder %s21, 0
          %s199 = scalar_select %p198, %s21, 0
          %s200 = sadd.s32 %s199, %s197
          %s201 = smul.addr %s200, 4
          %s202 = scalar_lea.vmem %s0, %s201
        $region20: #{span_classifier_fwd.3} parent=15 // pred_fallthru
          _
        // Predicated region
        $region21: #{span_classifier_fwd.3} parent=15 // pred_check
          %p203 = pneg %p82
        $region22: #{span_classifier_fwd.3} parent=15 // pred_check_branch
          %205 = sbr.rel (%p203) target = $region24
        $region23: #{span_classifier_fwd.3} parent=15 // pred_region
          %p206 = scmp.lt.s32.totalorder %s20, 1
          %s207 = scalar_select %p206, %s20, 1
          %p208 = scmp.lt.s32.totalorder %s22, 0
          %s209 = scalar_select %p208, %s22, 0
          %s210 = sadd.s32 %s209, %s207
          %s211 = smul.addr %s210, 4
          %s212 = scalar_lea.vmem %s1, %s211
        $region24: #{span_classifier_fwd.3} parent=15 // pred_fallthru
          _
        // Predicated region
        $region25: #{span_classifier_fwd.3} parent=15 // pred_check
          %p213 = pneg %p110
        $region26: #{span_classifier_fwd.3} parent=15 // pred_check_branch
          %215 = sbr.rel (%p213) target = $region28
        $region27: #{span_classifier_fwd.3} parent=15 // pred_region
          %p216 = scmp.lt.s32.totalorder %s20, 1
          %s217 = scalar_select %p216, %s20, 1
          %p218 = scmp.lt.s32.totalorder %s21, 0
          %s219 = scalar_select %p218, %s21, 0
          %s220 = sadd.s32 %s219, %s217
          %s221 = smul.addr %s220, 8
          %s222 = scalar_lea.vmem %s2, %s221
        $region28: #{span_classifier_fwd.3} parent=15 // pred_fallthru
          _
        // Predicated region
        $region29: #{span_classifier_fwd.3} parent=15 // pred_check
          %p223 = pneg %p138
        $region30: #{span_classifier_fwd.3} parent=15 // pred_check_branch
          %225 = sbr.rel (%p223) target = $region32
        $region31: #{span_classifier_fwd.3} parent=15 // pred_region
          %p226 = scmp.lt.s32.totalorder %s20, 1
          %s227 = scalar_select %p226, %s20, 1
          %p228 = scmp.lt.s32.totalorder %s22, 0
          %s229 = scalar_select %p228, %s22, 0
          %s230 = sadd.s32 %s229, %s227
          %s231 = scalar_lea.vmem %s3, %s230
        $region32: #{span_classifier_fwd.3} parent=15 // pred_fallthru
          _
      $region16: #{span_classifier_fwd.3} parent=5 // pred_fallthru
        _
      %p232 = scmp.le.s32.totalorder 1, %s13
      %p233 = scmp.lt.s32.totalorder %s13, 3
      %p234 = pnand %p232, %p233
      %p235 = pneg %p234
      // Predicated region
      $region33: #{span_classifier_fwd.3} parent=5 // pred_check
        _
      $region34: #{span_classifier_fwd.3} parent=5 // pred_check_branch
        %237 = sbr.rel (%p234) target = $region36
      $region35: #{span_classifier_fwd.3} parent=5 // pred_region
        %s238 = ssub.s32 %s13, 1
        %p239 = scmp.lt.s32.totalorder %s23, 1
        %s240 = scalar_select %p239, %s23, 1
        %p241 = scmp.lt.s32.totalorder %s24, 0
        %s242 = scalar_select %p241, %s24, 0
        %s243 = sadd.s32 %s242, %s240
        %s244 = smul.addr %s243, 4
        %s245 = scalar_lea.vmem %s0, %s244
        %p246 = pneg %p60
        %p247 = pneg %p57
        %p248 = scmp.lt.s32.totalorder %s23, 1
        %s249 = scalar_select %p248, %s23, 1
        %p250 = scmp.lt.s32.totalorder %s25, 0
        %s251 = scalar_select %p250, %s25, 0
        %s252 = sadd.s32 %s251, %s249
        %s253 = smul.addr %s252, 4
        %s254 = scalar_lea.vmem %s1, %s253
        %p255 = pneg %p88
        %p256 = pneg %p85
        %p257 = scmp.lt.s32.totalorder %s23, 1
        %s258 = scalar_select %p257, %s23, 1
        %p259 = scmp.lt.s32.totalorder %s24, 0
        %s260 = scalar_select %p259, %s24, 0
        %s261 = sadd.s32 %s260, %s258
        %s262 = smul.addr %s261, 8
        %s263 = scalar_lea.vmem %s2, %s262
        %p264 = pneg %p116
        %p265 = pneg %p113
        %p266 = scmp.lt.s32.totalorder %s23, 1
        %s267 = scalar_select %p266, %s23, 1
        %p268 = scmp.lt.s32.totalorder %s25, 0
        %s269 = scalar_select %p268, %s25, 0
        %s270 = sadd.s32 %s269, %s267
        %s271 = scalar_lea.vmem %s3, %s270
        %p272 = pneg %p144
        %p273 = pneg %p141
        %p274 = pneg %p174
        %p275 = pneg %p171
        %s276 = sand.u32 %s161, 1
        %s277 = scalar_lea.sflag [#allocation3], %s276
        %s278 = sand.u32 %s161, 1
        %s279 = smul.addr %s278, 8
        %s280 = scalar_lea.vmem [#allocation2], %s279
        %p281 = scmp.lt.s32.totalorder %s23, 1
        %s282 = scalar_select %p281, %s23, 1
        %p283 = scmp.lt.s32.totalorder %s24, 0
        %s284 = scalar_select %p283, %s24, 0
        %s285 = sadd.s32 %s284, %s282
        %s286 = smul.addr %s285, 4
        %s287 = scalar_lea.vmem %s0, %s286
        %p288 = scmp.lt.s32.totalorder %s23, 1
        %s289 = scalar_select %p288, %s23, 1
        %p290 = scmp.lt.s32.totalorder %s25, 0
        %s291 = scalar_select %p290, %s25, 0
        %s292 = sadd.s32 %s291, %s289
        %s293 = smul.addr %s292, 4
        %s294 = scalar_lea.vmem %s1, %s293
        %p295 = scmp.lt.s32.totalorder %s23, 1
        %s296 = scalar_select %p295, %s23, 1
        %p297 = scmp.lt.s32.totalorder %s24, 0
        %s298 = scalar_select %p297, %s24, 0
        %s299 = sadd.s32 %s298, %s296
        %s300 = smul.addr %s299, 8
        %s301 = scalar_lea.vmem %s2, %s300
        %p302 = scmp.lt.s32.totalorder %s23, 1
        %s303 = scalar_select %p302, %s23, 1
        %p304 = scmp.lt.s32.totalorder %s25, 0
        %s305 = scalar_select %p304, %s25, 0
        %s306 = sadd.s32 %s305, %s303
        %s307 = scalar_lea.vmem %s3, %s306
        %v309 = vld [vmem:[%s287] sm:$0xf]
        %v310 = vld [vmem:[%s294] sm:$0xf]
        %v311 = vld [vmem:[%s301] sm:$0xff]
        %313 = vset.pattern.permute.xlu0 0
        %314 = vperm.xlu0 %313, %v311
        %v315 = vpop.permute.xlu0 %314
        %vm317 = vcmask 261120
        %v319 = vsel %vm317, %v309, 0
        %v322 = vsel %vm317, %v310, 0
        %324 = vmatprep.subr.bf16.mxu0 0
        %325 = vmatpush1.bf16.xpose.msra.mxu0 0
        %326 = vmatprep.subr.bf16.mxu0 0
        %327 = vmatpush1.bf16.xpose.msra.mxu0 0
        %328 = vmatprep.subr.bf16.mxu0 0
        %329 = vmatpush1.bf16.xpose.msra.mxu0 0
        %330 = vmatprep.subr.bf16.mxu0 0
        %331 = vmatpush1.bf16.xpose.msra.mxu0 0
        %332 = vmatprep.subr.bf16.mxu0 0
        %333 = vmatpush1.bf16.xpose.msra.mxu0 0
        %334 = vmatprep.subr.bf16.mxu0 0
        %335 = vmatpush1.bf16.xpose.msra.mxu0 0
        %336 = vmatprep.subr.bf16.mxu0 0
        %337 = vmatpush1.bf16.xpose.msra.mxu0 0
        %338 = vmatprep.subr.bf16.mxu0 0
        %339 = vmatpush1.bf16.xpose.msra.mxu0 %v322
        %340 = vmatprep.subr.bf16.mxu0 0
        %341 = vmatpush2.bf16.xpose.msra.mxu0 0
        %342 = vmatprep.subr.bf16.mxu0 0
        %343 = vmatpush2.bf16.xpose.msra.mxu0 0
        %344 = vmatprep.subr.bf16.mxu0 0
        %345 = vmatpush2.bf16.xpose.msra.mxu0 0
        %346 = vmatprep.subr.bf16.mxu0 0
        %347 = vmatpush2.bf16.xpose.msra.mxu0 0
        %348 = vmatprep.subr.bf16.mxu0 0
        %349 = vmatpush2.bf16.xpose.msra.mxu0 0
        %350 = vmatprep.subr.bf16.mxu0 0
        %351 = vmatpush2.bf16.xpose.msra.mxu0 0
        %352 = vmatprep.subr.bf16.mxu0 0
        %353 = vmatpush2.bf16.xpose.msra.mxu0 0
        %354 = vmatprep.subr.bf16.mxu0 0
        %355 = vmatpush2.bf16.xpose.msra.mxu0 0
        %356 = vmatprep.mubr.bf16.mxu0 0
        %357 = vmatmul.mubr.bf16.gmra.mxu0 %v319
        %v358 = vpop.f32.mrf.mxu0
        %v359 = vadd.f32 %v315, %v358
        %v360 = vpop.f32.mrf.mxu0
        %v361 = vpop.f32.mrf.mxu0
        %v362 = vpop.f32.mrf.mxu0
        %363 = vdwg.mxu0
        %v364 = vld [vmem:[%s307] sm:$0x1]
        %v366 = vlaneseq
        %v367 = vshrl.u32 %v366, 7
        %v368 = vsub.s32 0, %v367
        %v369 = vrot.slane %v364, %v368
        %v371 = vadd.f32 %v359, %v369
        %vm372 = vcmask 64512
        %373 = vst.msk [vmem:[%s280] sm:$0xff] %vm372, %v371
        %s374 = sand.u32 %s161, 1
        %s375 = scalar_lea.sflag [#allocation3], %s374
        %s376 = sand.u32 %s161, 1
        %s377 = smul.addr %s376, 8
        %s378 = scalar_lea.vmem [#allocation2], %s377
        // Predicated region
        $region37: #{span_classifier_fwd.3} parent=35 // pred_check
          %p379 = pneg %p171
        $region38: #{span_classifier_fwd.3} parent=35 // pred_check_branch
          %381 = sbr.rel (%p379) target = $region40
        $region39: #{span_classifier_fwd.3} parent=35 // pred_region
          %s383 = ssub.s32 128, 128
          %384 = vsyncadd %s375, %s383
          %s385 = sadd.s32 %s25, %s24
          %s386 = sadd.s32 %s385, %s23
          %s387 = smul.addr %s386, 128
          %s388 = scalar_lea.hbm %s4, %s387
          %s390 = sshll.u32 %s378, 4
          %s391 = int_to_ptr.vmem [resolvable:$true] %s390
          %393 = dma.vmem_to_hbm [thread:$0]  %s391, 128, %s388, %s375
        $region40: #{span_classifier_fwd.3} parent=35 // pred_fallthru
          _
      $region36: #{span_classifier_fwd.3} parent=5 // pred_fallthru
        _
      %p394 = scmp.le.s32.totalorder 2, %s13
      // Predicated region
      $region41: #{span_classifier_fwd.3} parent=5 // pred_check
        %p395 = pneg %p394
      $region42: #{span_classifier_fwd.3} parent=5 // pred_check_branch
        %397 = sbr.rel (%p395) target = $region44
      $region43: #{span_classifier_fwd.3} parent=5 // pred_region
        %s398 = ssub.s32 %s13, 2
        // Predicated region
        $region45: #{span_classifier_fwd.3} parent=43 // pred_check
          %p399 = pneg %p177
        $region46: #{span_classifier_fwd.3} parent=43 // pred_check_branch
          %401 = sbr.rel (%p399) target = $region48
        $region47: #{span_classifier_fwd.3} parent=43 // pred_region
          %s402 = sand.u32 %s162, 1
          %s403 = scalar_lea.sflag [#allocation3], %s402
          %s404 = sand.u32 %s162, 1
          %s405 = smul.addr %s404, 8
          %s406 = scalar_lea.vmem [#allocation2], %s405
          %407 = dma.done %s403, 128
        $region48: #{span_classifier_fwd.3} parent=43 // pred_fallthru
          _
      $region44: #{span_classifier_fwd.3} parent=5 // pred_fallthru
        _
    $region6: #{span_classifier_fwd.3} parent=1 // loop_footer
      %s17 = sadd.s32 1, %s13
    $region7: #{span_classifier_fwd.3} parent=1 // loop_footer_branch
      %12 = sbr.rel target = $region3
    $region8: #{span_classifier_fwd.3} parent=1 // loop_exit
      _
    %408 = vsyncpa [#allocation3], 1
    %s409 = scalar_lea.sflag [#allocation3], 1
    %410 = vsyncpa %s409, 1

// kernel: span_classifier_fwd.2
$region0: #{span_classifier_fwd.2}
  #allocation0 [shape = 'u32[]', space=smem, size = 0x4, offset = 0x4, fixed_abs, tag = 'smem constant byte address 0x4 - core index']
  #allocation1 [shape = 'u32[144,128]{1,0:T(1,128)}', space=vmem, size = 0x12000, scoped, tag = 'internal scratch']
  #allocation2 [shape = 'f32[1,1]{1,0:T(1,128)S(1)}', space=vmem, size = 0x200, scoped, tag = 'scoped memory for span_classifier_fwd.2']
  %s0 = inlined_call_operand.vmem [shape: f32[2,8,32], index: 0, kind: input, shape index: {}]
  %s1 = inlined_call_operand.vmem [shape: bf16[32,32], index: 1, kind: input, shape index: {}]
  %s2 = inlined_call_operand.vmem [shape: f32[1,32], index: 2, kind: input, shape index: {}]
  %s3 = inlined_call_operand.vmem [shape: bf16[32,32], index: 3, kind: input, shape index: {}]
  %s4 = inlined_call_operand.vmem [shape: f32[1,32], index: 4, kind: input, shape index: {}]
  %s5 = inlined_call_operand.vmem [shape: bf16[32,32], index: 5, kind: input, shape index: {}]
  %s6 = inlined_call_operand.vmem [shape: f32[1,32], index: 6, kind: input, shape index: {}]
  %s7 = inlined_call_operand.vmem [shape: f32[1,32], index: 7, kind: input, shape index: {}]
  %s8 = inlined_call_operand.<no memory space> [shape: f32[1,1], index: 8, kind: input, shape index: {}]
  %s9 = inlined_call_operand.vmem [shape: bf16[2,8,32], index: 9, kind: output, shape index: {0}]
  %s10 = inlined_call_operand.vmem [shape: bf16[2,8,32], index: 10, kind: output, shape index: {1}]
  %s11 = inlined_call_operand.vmem [shape: f32[2,8,1], index: 11, kind: output, shape index: {2}]
  %s12 = inlined_call_operand.vmem [shape: f32[2,8,1], index: 12, kind: output, shape index: {3}]
  %13 = xla_tuple %s9, %s10, %s11, %s12
  %s14 = sld [smem:[#allocation0]]
  $region93: #{span_classifier_fwd.2} parent=0
    _
  %s16 = ssub.s32 1, %s14
  %s17 = scalar_select 0, %s16, %s14
  %v18 = vstv %s8
  %19 = vst [vmem:[#allocation2] sm:$0x1] %v18
  loop: start=0, step=1, limit=4
  $region2: #{span_classifier_fwd.2} parent=0 // loop_pre_header
    _
  $region3: #{span_classifier_fwd.2} parent=0 // loop_header
    %s21 = sphi 0, %s25
    %p22 = scmp.ge.s32.totalorder %s21, 4
    %s28 = sphi 0, %s40
    %s29 = sphi 0, %s36
    %s30 = sphi 0, %s28
    %s31 = sphi 0, %s29
    %s32 = sphi 0, %s30
    %s33 = sphi 0, %s31
    %s45 = sphi 0, %s47
    %s48 = sphi 0, %s45
    %s49 = sphi 0, %s48
    %s65 = sphi 0, %s49
    %s69 = sphi 0, %s69
    %s71 = sphi 0, %s69
    %s72 = sphi 0, %s71
    %s86 = sphi 0, %s72
    %s90 = sphi 0, %s90
    %s92 = sphi 0, %s90
    %s93 = sphi 0, %s92
    %s107 = sphi 0, %s93
    %s111 = sphi 0, %s111
    %s113 = sphi 0, %s111
    %s114 = sphi 0, %s113
    %s128 = sphi 0, %s114
    %s132 = sphi 0, %s132
    %s134 = sphi 0, %s132
    %s135 = sphi 0, %s134
    %s149 = sphi 0, %s135
    %s153 = sphi 0, %s153
    %s155 = sphi 0, %s153
    %s156 = sphi 0, %s155
    %s170 = sphi 0, %s156
    %s174 = sphi 0, %s174
    %s176 = sphi 0, %s174
    %s177 = sphi 0, %s176
    %s191 = sphi 0, %s177
    %s195 = sphi 0, %s195
    %s197 = sphi 0, %s195
    %s198 = sphi 0, %s197
    %s212 = sphi 0, %s198
    %s216 = sphi 0, %s216
    %s218 = sphi 0, %s216
    %s219 = sphi 0, %s218
    %s233 = sphi 0, %s219
    %s241 = sphi 0, %s243
    %s244 = sphi 0, %s241
    %s245 = sphi 0, %s244
    %s261 = sphi 0, %s245
    %s269 = sphi 0, %s271
    %s272 = sphi 0, %s269
    %s273 = sphi 0, %s272
    %s289 = sphi 0, %s273
    %s297 = sphi 0, %s299
    %s300 = sphi 0, %s297
    %s301 = sphi 0, %s300
    %s317 = sphi 0, %s301
    %s325 = sphi 0, %s327
    %s328 = sphi 0, %s325
    %s329 = sphi 0, %s328
    %s345 = sphi 0, %s329
  $region4: #{span_classifier_fwd.2} parent=0 // loop_header_branch
    %24 = sbr.rel (%p22) target = $region8
  $region5: #{span_classifier_fwd.2} parent=0 // loop_body
    %s26 = ssub.s32 %s21, 1
    %s27 = ssub.s32 %s21, 2
    %s34 = sadd.s32 1, %s29
    %p35 = scmp.ge.s32.totalorder %s34, 1
    %s36 = scalar_select %p35, 0, %s34
    %s37 = sadd.s32 1, %s28
    %s38 = scalar_select %p35, %s37, %s28
    %p39 = scmp.ge.s32.totalorder %s38, 2
    %s40 = scalar_select %p39, 0, %s38
    %s41 = ssub.s32 %s28, %s40
    %s42 = ssub.s32 %s29, %s36
    %s43 = sor.u32 %s41, %s42
    %p44 = scmp.eq.s32.totalorder %s43, 0
    %s46 = sadd.s32 %s45, 1
    %s47 = scalar_select %p44, %s45, %s46
    %p50 = pneg %p44
    %p51 = scmp.eq.s32.totalorder %s21, 1
    %p52 = por %p50, %p51
    %p53 = scmp.ne.s32.totalorder %s45, %s48
    %p54 = scmp.eq.s32.totalorder %s21, 0
    %p55 = por %p53, %p54
    %p56 = scmp.ne.s32.totalorder %s45, %s48
    %p57 = scmp.eq.s32.totalorder %s26, 1
    %p58 = por %p56, %p57
    %p59 = scmp.ne.s32.totalorder %s48, %s49
    %p60 = scmp.eq.s32.totalorder %s26, 0
    %p61 = por %p59, %p60
    %p62 = scmp.ne.s32.totalorder %s48, %s49
    %p63 = scmp.eq.s32.totalorder %s27, 1
    %p64 = por %p62, %p63
    %p66 = scmp.ne.s32.totalorder %s49, %s65
    %p67 = scmp.eq.s32.totalorder %s27, 0
    %p68 = por %p66, %p67
    %s70 = sadd.s32 %s69, 1
    %p73 = scmp.eq.s32.totalorder %s21, 1
    %p74 = scmp.ne.s32.totalorder %s69, %s71
    %p75 = scmp.eq.s32.totalorder %s21, 0
    %p76 = por %p74, %p75
    %p77 = scmp.ne.s32.totalorder %s69, %s71
    %p78 = scmp.eq.s32.totalorder %s26, 1
    %p79 = por %p77, %p78
    %p80 = scmp.ne.s32.totalorder %s71, %s72
    %p81 = scmp.eq.s32.totalorder %s26, 0
    %p82 = por %p80, %p81
    %p83 = scmp.ne.s32.totalorder %s71, %s72
    %p84 = scmp.eq.s32.totalorder %s27, 1
    %p85 = por %p83, %p84
    %p87 = scmp.ne.s32.totalorder %s72, %s86
    %p88 = scmp.eq.s32.totalorder %s27, 0
    %p89 = por %p87, %p88
    %s91 = sadd.s32 %s90, 1
    %p94 = scmp.eq.s32.totalorder %s21, 1
    %p95 = scmp.ne.s32.totalorder %s90, %s92
    %p96 = scmp.eq.s32.totalorder %s21, 0
    %p97 = por %p95, %p96
    %p98 = scmp.ne.s32.totalorder %s90, %s92
    %p99 = scmp.eq.s32.totalorder %s26, 1
    %p100 = por %p98, %p99
    %p101 = scmp.ne.s32.totalorder %s92, %s93
    %p102 = scmp.eq.s32.totalorder %s26, 0
    %p103 = por %p101, %p102
    %p104 = scmp.ne.s32.totalorder %s92, %s93
    %p105 = scmp.eq.s32.totalorder %s27, 1
    %p106 = por %p104, %p105
    %p108 = scmp.ne.s32.totalorder %s93, %s107
    %p109 = scmp.eq.s32.totalorder %s27, 0
    %p110 = por %p108, %p109
    %s112 = sadd.s32 %s111, 1
    %p115 = scmp.eq.s32.totalorder %s21, 1
    %p116 = scmp.ne.s32.totalorder %s111, %s113
    %p117 = scmp.eq.s32.totalorder %s21, 0
    %p118 = por %p116, %p117
    %p119 = scmp.ne.s32.totalorder %s111, %s113
    %p120 = scmp.eq.s32.totalorder %s26, 1
    %p121 = por %p119, %p120
    %p122 = scmp.ne.s32.totalorder %s113, %s114
    %p123 = scmp.eq.s32.totalorder %s26, 0
    %p124 = por %p122, %p123
    %p125 = scmp.ne.s32.totalorder %s113, %s114
    %p126 = scmp.eq.s32.totalorder %s27, 1
    %p127 = por %p125, %p126
    %p129 = scmp.ne.s32.totalorder %s114, %s128
    %p130 = scmp.eq.s32.totalorder %s27, 0
    %p131 = por %p129, %p130
    %s133 = sadd.s32 %s132, 1
    %p136 = scmp.eq.s32.totalorder %s21, 1
    %p137 = scmp.ne.s32.totalorder %s132, %s134
    %p138 = scmp.eq.s32.totalorder %s21, 0
    %p139 = por %p137, %p138
    %p140 = scmp.ne.s32.totalorder %s132, %s134
    %p141 = scmp.eq.s32.totalorder %s26, 1
    %p142 = por %p140, %p141
    %p143 = scmp.ne.s32.totalorder %s134, %s135
    %p144 = scmp.eq.s32.totalorder %s26, 0
    %p145 = por %p143, %p144
    %p146 = scmp.ne.s32.totalorder %s134, %s135
    %p147 = scmp.eq.s32.totalorder %s27, 1
    %p148 = por %p146, %p147
    %p150 = scmp.ne.s32.totalorder %s135, %s149
    %p151 = scmp.eq.s32.totalorder %s27, 0
    %p152 = por %p150, %p151
    %s154 = sadd.s32 %s153, 1
    %p157 = scmp.eq.s32.totalorder %s21, 1
    %p158 = scmp.ne.s32.totalorder %s153, %s155
    %p159 = scmp.eq.s32.totalorder %s21, 0
    %p160 = por %p158, %p159
    %p161 = scmp.ne.s32.totalorder %s153, %s155
    %p162 = scmp.eq.s32.totalorder %s26, 1
    %p163 = por %p161, %p162
    %p164 = scmp.ne.s32.totalorder %s155, %s156
    %p165 = scmp.eq.s32.totalorder %s26, 0
    %p166 = por %p164, %p165
    %p167 = scmp.ne.s32.totalorder %s155, %s156
    %p168 = scmp.eq.s32.totalorder %s27, 1
    %p169 = por %p167, %p168
    %p171 = scmp.ne.s32.totalorder %s156, %s170
    %p172 = scmp.eq.s32.totalorder %s27, 0
    %p173 = por %p171, %p172
    %s175 = sadd.s32 %s174, 1
    %p178 = scmp.eq.s32.totalorder %s21, 1
    %p179 = scmp.ne.s32.totalorder %s174, %s176
    %p180 = scmp.eq.s32.totalorder %s21, 0
    %p181 = por %p179, %p180
    %p182 = scmp.ne.s32.totalorder %s174, %s176
    %p183 = scmp.eq.s32.totalorder %s26, 1
    %p184 = por %p182, %p183
    %p185 = scmp.ne.s32.totalorder %s176, %s177
    %p186 = scmp.eq.s32.totalorder %s26, 0
    %p187 = por %p185, %p186
    %p188 = scmp.ne.s32.totalorder %s176, %s177
    %p189 = scmp.eq.s32.totalorder %s27, 1
    %p190 = por %p188, %p189
    %p192 = scmp.ne.s32.totalorder %s177, %s191
    %p193 = scmp.eq.s32.totalorder %s27, 0
    %p194 = por %p192, %p193
    %s196 = sadd.s32 %s195, 1
    %p199 = scmp.eq.s32.totalorder %s21, 1
    %p200 = scmp.ne.s32.totalorder %s195, %s197
    %p201 = scmp.eq.s32.totalorder %s21, 0
    %p202 = por %p200, %p201
    %p203 = scmp.ne.s32.totalorder %s195, %s197
    %p204 = scmp.eq.s32.totalorder %s26, 1
    %p205 = por %p203, %p204
    %p206 = scmp.ne.s32.totalorder %s197, %s198
    %p207 = scmp.eq.s32.totalorder %s26, 0
    %p208 = por %p206, %p207
    %p209 = scmp.ne.s32.totalorder %s197, %s198
    %p210 = scmp.eq.s32.totalorder %s27, 1
    %p211 = por %p209, %p210
    %p213 = scmp.ne.s32.totalorder %s198, %s212
    %p214 = scmp.eq.s32.totalorder %s27, 0
    %p215 = por %p213, %p214
    %s217 = sadd.s32 %s216, 1
    %p220 = scmp.eq.s32.totalorder %s21, 1
    %p221 = scmp.ne.s32.totalorder %s216, %s218
    %p222 = scmp.eq.s32.totalorder %s21, 0
    %p223 = por %p221, %p222
    %p224 = scmp.ne.s32.totalorder %s216, %s218
    %p225 = scmp.eq.s32.totalorder %s26, 1
    %p226 = por %p224, %p225
    %p227 = scmp.ne.s32.totalorder %s218, %s219
    %p228 = scmp.eq.s32.totalorder %s26, 0
    %p229 = por %p227, %p228
    %p230 = scmp.ne.s32.totalorder %s218, %s219
    %p231 = scmp.eq.s32.totalorder %s27, 1
    %p232 = por %p230, %p231
    %p234 = scmp.ne.s32.totalorder %s219, %s233
    %p235 = scmp.eq.s32.totalorder %s27, 0
    %p236 = por %p234, %p235
    %s237 = ssub.s32 %s28, %s40
    %s238 = ssub.s32 %s29, %s36
    %s239 = sor.u32 %s237, %s238
    %p240 = scmp.eq.s32.totalorder %s239, 0
    %s242 = sadd.s32 %s241, 1
    %s243 = scalar_select %p240, %s241, %s242
    %p246 = pneg %p240
    %p247 = scmp.eq.s32.totalorder %s21, 1
    %p248 = por %p246, %p247
    %p249 = scmp.ne.s32.totalorder %s241, %s244
    %p250 = scmp.eq.s32.totalorder %s21, 0
    %p251 = por %p249, %p250
    %p252 = scmp.ne.s32.totalorder %s241, %s244
    %p253 = scmp.eq.s32.totalorder %s26, 1
    %p254 = por %p252, %p253
    %p255 = scmp.ne.s32.totalorder %s244, %s245
    %p256 = scmp.eq.s32.totalorder %s26, 0
    %p257 = por %p255, %p256
    %p258 = scmp.ne.s32.totalorder %s244, %s245
    %p259 = scmp.eq.s32.totalorder %s27, 1
    %p260 = por %p258, %p259
    %p262 = scmp.ne.s32.totalorder %s245, %s261
    %p263 = scmp.eq.s32.totalorder %s27, 0
    %p264 = por %p262, %p263
    %s265 = ssub.s32 %s28, %s40
    %s266 = ssub.s32 %s29, %s36
    %s267 = sor.u32 %s265, %s266
    %p268 = scmp.eq.s32.totalorder %s267, 0
    %s270 = sadd.s32 %s269, 1
    %s271 = scalar_select %p268, %s269, %s270
    %p274 = pneg %p268
    %p275 = scmp.eq.s32.totalorder %s21, 1
    %p276 = por %p274, %p275
    %p277 = scmp.ne.s32.totalorder %s269, %s272
    %p278 = scmp.eq.s32.totalorder %s21, 0
    %p279 = por %p277, %p278
    %p280 = scmp.ne.s32.totalorder %s269, %s272
    %p281 = scmp.eq.s32.totalorder %s26, 1
    %p282 = por %p280, %p281
    %p283 = scmp.ne.s32.totalorder %s272, %s273
    %p284 = scmp.eq.s32.totalorder %s26, 0
    %p285 = por %p283, %p284
    %p286 = scmp.ne.s32.totalorder %s272, %s273
    %p287 = scmp.eq.s32.totalorder %s27, 1
    %p288 = por %p286, %p287
    %p290 = scmp.ne.s32.totalorder %s273, %s289
    %p291 = scmp.eq.s32.totalorder %s27, 0
    %p292 = por %p290, %p291
    %s293 = ssub.s32 %s28, %s40
    %s294 = ssub.s32 %s29, %s36
    %s295 = sor.u32 %s293, %s294
    %p296 = scmp.eq.s32.totalorder %s295, 0
    %s298 = sadd.s32 %s297, 1
    %s299 = scalar_select %p296, %s297, %s298
    %p302 = pneg %p296
    %p303 = scmp.eq.s32.totalorder %s21, 1
    %p304 = por %p302, %p303
    %p305 = scmp.ne.s32.totalorder %s297, %s300
    %p306 = scmp.eq.s32.totalorder %s21, 0
    %p307 = por %p305, %p306
    %p308 = scmp.ne.s32.totalorder %s297, %s300
    %p309 = scmp.eq.s32.totalorder %s26, 1
    %p310 = por %p308, %p309
    %p311 = scmp.ne.s32.totalorder %s300, %s301
    %p312 = scmp.eq.s32.totalorder %s26, 0
    %p313 = por %p311, %p312
    %p314 = scmp.ne.s32.totalorder %s300, %s301
    %p315 = scmp.eq.s32.totalorder %s27, 1
    %p316 = por %p314, %p315
    %p318 = scmp.ne.s32.totalorder %s301, %s317
    %p319 = scmp.eq.s32.totalorder %s27, 0
    %p320 = por %p318, %p319
    %s321 = ssub.s32 %s28, %s40
    %s322 = ssub.s32 %s29, %s36
    %s323 = sor.u32 %s321, %s322
    %p324 = scmp.eq.s32.totalorder %s323, 0
    %s326 = sadd.s32 %s325, 1
    %s327 = scalar_select %p324, %s325, %s326
    %p330 = pneg %p324
    %p331 = scmp.eq.s32.totalorder %s21, 1
    %p332 = por %p330, %p331
    %p333 = scmp.ne.s32.totalorder %s325, %s328
    %p334 = scmp.eq.s32.totalorder %s21, 0
    %p335 = por %p333, %p334
    %p336 = scmp.ne.s32.totalorder %s325, %s328
    %p337 = scmp.eq.s32.totalorder %s26, 1
    %p338 = por %p336, %p337
    %p339 = scmp.ne.s32.totalorder %s328, %s329
    %p340 = scmp.eq.s32.totalorder %s26, 0
    %p341 = por %p339, %p340
    %p342 = scmp.ne.s32.totalorder %s328, %s329
    %p343 = scmp.eq.s32.totalorder %s27, 1
    %p344 = por %p342, %p343
    %p346 = scmp.ne.s32.totalorder %s329, %s345
    %p347 = scmp.eq.s32.totalorder %s27, 0
    %p348 = por %p346, %p347
    %p349 = scmp.le.s32.totalorder 1, %s21
    %p350 = scmp.lt.s32.totalorder %s21, 3
    %p351 = pnand %p349, %p350
    %p352 = pneg %p351
    // Predicated region
    $region9: #{span_classifier_fwd.2} parent=5 // pred_check
      _
    $region10: #{span_classifier_fwd.2} parent=5 // pred_check_branch
      %354 = sbr.rel (%p351) target = $region12
    $region11: #{span_classifier_fwd.2} parent=5 // pred_region
      %s355 = ssub.s32 %s21, 1
      // Predicated region
      $region13: #{span_classifier_fwd.2} parent=11 // pred_check
        %p356 = pneg %p82
      $region14: #{span_classifier_fwd.2} parent=11 // pred_check_branch
        %358 = sbr.rel (%p356) target = $region16
      $region15: #{span_classifier_fwd.2} parent=11 // pred_region
        _
      $region16: #{span_classifier_fwd.2} parent=11 // pred_fallthru
        _
      // Predicated region
      $region17: #{span_classifier_fwd.2} parent=11 // pred_check
        %p359 = pneg %p103
      $region18: #{span_classifier_fwd.2} parent=11 // pred_check_branch
        %361 = sbr.rel (%p359) target = $region20
      $region19: #{span_classifier_fwd.2} parent=11 // pred_region
        _
      $region20: #{span_classifier_fwd.2} parent=11 // pred_fallthru
        _
      // Predicated region
      $region21: #{span_classifier_fwd.2} parent=11 // pred_check
        %p362 = pneg %p124
      $region22: #{span_classifier_fwd.2} parent=11 // pred_check_branch
        %364 = sbr.rel (%p362) target = $region24
      $region23: #{span_classifier_fwd.2} parent=11 // pred_region
        _
      $region24: #{span_classifier_fwd.2} parent=11 // pred_fallthru
        _
      // Predicated region
      $region25: #{span_classifier_fwd.2} parent=11 // pred_check
        %p365 = pneg %p145
      $region26: #{span_classifier_fwd.2} parent=11 // pred_check_branch
        %367 = sbr.rel (%p365) target = $region28
      $region27: #{span_classifier_fwd.2} parent=11 // pred_region
        _
      $region28: #{span_classifier_fwd.2} parent=11 // pred_fallthru
        _
      // Predicated region
      $region29: #{span_classifier_fwd.2} parent=11 // pred_check
        %p368 = pneg %p166
      $region30: #{span_classifier_fwd.2} parent=11 // pred_check_branch
        %370 = sbr.rel (%p368) target = $region32
      $region31: #{span_classifier_fwd.2} parent=11 // pred_region
        _
      $region32: #{span_classifier_fwd.2} parent=11 // pred_fallthru
        _
      // Predicated region
      $region33: #{span_classifier_fwd.2} parent=11 // pred_check
        %p371 = pneg %p187
      $region34: #{span_classifier_fwd.2} parent=11 // pred_check_branch
        %373 = sbr.rel (%p371) target = $region36
      $region35: #{span_classifier_fwd.2} parent=11 // pred_region
        _
      $region36: #{span_classifier_fwd.2} parent=11 // pred_fallthru
        _
      // Predicated region
      $region37: #{span_classifier_fwd.2} parent=11 // pred_check
        %p374 = pneg %p208
      $region38: #{span_classifier_fwd.2} parent=11 // pred_check_branch
        %376 = sbr.rel (%p374) target = $region40
      $region39: #{span_classifier_fwd.2} parent=11 // pred_region
        _
      $region40: #{span_classifier_fwd.2} parent=11 // pred_fallthru
        _
      // Predicated region
      $region41: #{span_classifier_fwd.2} parent=11 // pred_check
        %p377 = pneg %p229
      $region42: #{span_classifier_fwd.2} parent=11 // pred_check_branch
        %379 = sbr.rel (%p377) target = $region44
      $region43: #{span_classifier_fwd.2} parent=11 // pred_region
        _
      $region44: #{span_classifier_fwd.2} parent=11 // pred_fallthru
        _
    $region12: #{span_classifier_fwd.2} parent=5 // pred_fallthru
      _
    %p380 = scmp.lt.s32.totalorder %s21, 2
    // Predicated region
    $region45: #{span_classifier_fwd.2} parent=5 // pred_check
      %p381 = pneg %p380
    $region46: #{span_classifier_fwd.2} parent=5 // pred_check_branch
      %383 = sbr.rel (%p381) target = $region48
    $region47: #{span_classifier_fwd.2} parent=5 // pred_region
      // Predicated region
      $region49: #{span_classifier_fwd.2} parent=47 // pred_check
        %p384 = pneg %p55
      $region50: #{span_classifier_fwd.2} parent=47 // pred_check_branch
        %386 = sbr.rel (%p384) target = $region52
      $region51: #{span_classifier_fwd.2} parent=47 // pred_region
        %p387 = scmp.lt.s32.totalorder %s28, 1
        %s388 = scalar_select %p387, %s28, 1
        %p389 = scmp.lt.s32.totalorder %s29, 0
        %s390 = scalar_select %p389, %s29, 0
        %s391 = sadd.s32 %s390, %s388
        %s392 = smul.addr %s391, 8
        %s393 = scalar_lea.vmem %s0, %s392
      $region52: #{span_classifier_fwd.2} parent=47 // pred_fallthru
        _
    $region48: #{span_classifier_fwd.2} parent=5 // pred_fallthru
      _
    %p394 = scmp.le.s32.totalorder 1, %s21
    %p395 = scmp.lt.s32.totalorder %s21, 3
    %p396 = pnand %p394, %p395
    %p397 = pneg %p396
    // Predicated region
    $region53: #{span_classifier_fwd.2} parent=5 // pred_check
      _
    $region54: #{span_classifier_fwd.2} parent=5 // pred_check_branch
      %399 = sbr.rel (%p396) target = $region56
    $region55: #{span_classifier_fwd.2} parent=5 // pred_region
      %s400 = ssub.s32 %s21, 1
      %p401 = scmp.lt.s32.totalorder %s30, 1
      %s402 = scalar_select %p401, %s30, 1
      %p403 = scmp.lt.s32.totalorder %s31, 0
      %s404 = scalar_select %p403, %s31, 0
      %s405 = sadd.s32 %s404, %s402
      %s406 = smul.addr %s405, 8
      %s407 = scalar_lea.vmem %s0, %s406
      %p408 = pneg %p61
      %p409 = pneg %p58
      %p410 = pneg %p82
      %p411 = pneg %p79
      %p412 = pneg %p103
      %p413 = pneg %p100
      %p414 = pneg %p124
      %p415 = pneg %p121
      %p416 = pneg %p145
      %p417 = pneg %p142
      %p418 = pneg %p166
      %p419 = pneg %p163
      %p420 = pneg %p187
      %p421 = pneg %p184
      %p422 = pneg %p208
      %p423 = pneg %p205
      %p424 = pneg %p229
      %p425 = pneg %p226
      %p426 = pneg %p257
      %p427 = pneg %p254
      %p428 = scmp.lt.s32.totalorder %s30, 1
      %s429 = scalar_select %p428, %s30, 1
      %p430 = scmp.lt.s32.totalorder %s31, 0
      %s431 = scalar_select %p430, %s31, 0
      %s432 = sadd.s32 %s431, %s429
      %s433 = smul.addr %s432, 4
      %s434 = scalar_lea.vmem %s9, %s433
      %p435 = pneg %p285
      %p436 = pneg %p282
      %p437 = scmp.lt.s32.totalorder %s30, 1
      %s438 = scalar_select %p437, %s30, 1
      %p439 = scmp.lt.s32.totalorder %s31, 0
      %s440 = scalar_select %p439, %s31, 0
      %s441 = sadd.s32 %s440, %s438
      %s442 = smul.addr %s441, 4
      %s443 = scalar_lea.vmem %s10, %s442
      %p444 = pneg %p313
      %p445 = pneg %p310
      %p446 = scmp.lt.s32.totalorder %s30, 1
      %s447 = scalar_select %p446, %s30, 1
      %p448 = scmp.lt.s32.totalorder %s31, 0
      %s449 = scalar_select %p448, %s31, 0
      %s450 = sadd.s32 %s449, %s447
      %s451 = smul.addr %s450, 8
      %s452 = scalar_lea.vmem %s11, %s451
      %p453 = pneg %p341
      %p454 = pneg %p338
      %p455 = scmp.lt.s32.totalorder %s30, 1
      %s456 = scalar_select %p455, %s30, 1
      %p457 = scmp.lt.s32.totalorder %s31, 0
      %s458 = scalar_select %p457, %s31, 0
      %s459 = sadd.s32 %s458, %s456
      %s460 = smul.addr %s459, 8
      %s461 = scalar_lea.vmem %s12, %s460
      %p462 = scmp.lt.s32.totalorder %s30, 1
      %s463 = scalar_select %p462, %s30, 1
      %p464 = scmp.lt.s32.totalorder %s31, 0
      %s465 = scalar_select %p464, %s31, 0
      %s466 = sadd.s32 %s465, %s463
      %s467 = smul.addr %s466, 8
      %s468 = scalar_lea.vmem %s0, %s467
      %p469 = scmp.lt.s32.totalorder %s30, 1
      %s470 = scalar_select %p469, %s30, 1
      %p471 = scmp.lt.s32.totalorder %s31, 0
      %s472 = scalar_select %p471, %s31, 0
      %s473 = sadd.s32 %s472, %s470
      %s474 = smul.addr %s473, 4
      %s475 = scalar_lea.vmem %s9, %s474
      %p476 = scmp.lt.s32.totalorder %s30, 1
      %s477 = scalar_select %p476, %s30, 1
      %p478 = scmp.lt.s32.totalorder %s31, 0
      %s479 = scalar_select %p478, %s31, 0
      %s480 = sadd.s32 %s479, %s477
      %s481 = smul.addr %s480, 4
      %s482 = scalar_lea.vmem %s10, %s481
      %p483 = scmp.lt.s32.totalorder %s30, 1
      %s484 = scalar_select %p483, %s30, 1
      %p485 = scmp.lt.s32.totalorder %s31, 0
      %s486 = scalar_select %p485, %s31, 0
      %s487 = sadd.s32 %s486, %s484
      %s488 = smul.addr %s487, 8
      %s489 = scalar_lea.vmem %s11, %s488
      %p490 = scmp.lt.s32.totalorder %s30, 1
      %s491 = scalar_select %p490, %s30, 1
      %p492 = scmp.lt.s32.totalorder %s31, 0
      %s493 = scalar_select %p492, %s31, 0
      %s494 = sadd.s32 %s493, %s491
      %s495 = smul.addr %s494, 8
      %s496 = scalar_lea.vmem %s12, %s495
      %v498 = vld [vmem:[%s468] sm:$0xff]
      %v499 = vpack.c.bf16 %v498, %v498
      %v500 = vld [vmem:[%s1] sm:$0xf]
      %v501 = vld [vmem:[%s1 + $0x4] sm:$0xf]
      %v502 = vld [vmem:[%s1 + $0x8] sm:$0xf]
      %v503 = vld [vmem:[%s1 + $0xc] sm:$0xf]
      %v504 = vld [vmem:[%s2] sm:$0x1]
      %v506 = vlaneseq
      %v507 = vshrl.u32 %v506, 7
      %v508 = vsub.s32 0, %v507
      %v509 = vrot.slane %v504, %v508
      %v515 = vunpack.c.l.b16 %v500
      %v516 = vunpack.c.l.b16 %v501
      %v517 = vunpack.c.l.b16 %v502
      %v518 = vunpack.c.l.b16 %v503
      %v519 = vpack.c.b16 %v516, %v515
      %v520 = vpack.c.b16 %v518, %v517
      %vm523 = vcmask 261120
      %v525 = vsel %vm523, %v499, 0
      %527 = vmatprep.subr.bf16.mxu0 0
      %528 = vmatpush1.bf16.msra.mxu0 0
      %529 = vmatprep.subr.bf16.mxu0 0
      %530 = vmatpush1.bf16.msra.mxu0 0
      %531 = vmatprep.subr.bf16.mxu0 0
      %532 = vmatpush1.bf16.msra.mxu0 0
      %533 = vmatprep.subr.bf16.mxu0 0
      %534 = vmatpush1.bf16.msra.mxu0 0
      %535 = vmatprep.subr.bf16.mxu0 0
      %536 = vmatpush1.bf16.msra.mxu0 0
      %537 = vmatprep.subr.bf16.mxu0 0
      %538 = vmatpush1.bf16.msra.mxu0 0
      %539 = vmatprep.subr.bf16.mxu0 0
      %540 = vmatpush1.bf16.msra.mxu0 %v520
      %541 = vmatprep.subr.bf16.mxu0 0
      %542 = vmatpush1.bf16.msra.mxu0 %v519
      %543 = vmatprep.subr.bf16.mxu0 0
      %544 = vmatpush2.bf16.msra.mxu0 0
      %545 = vmatprep.subr.bf16.mxu0 0
      %546 = vmatpush2.bf16.msra.mxu0 0
      %547 = vmatprep.subr.bf16.mxu0 0
      %548 = vmatpush2.bf16.msra.mxu0 0
      %549 = vmatprep.subr.bf16.mxu0 0
      %550 = vmatpush2.bf16.msra.mxu0 0
      %551 = vmatprep.subr.bf16.mxu0 0
      %552 = vmatpush2.bf16.msra.mxu0 0
      %553 = vmatprep.subr.bf16.mxu0 0
      %554 = vmatpush2.bf16.msra.mxu0 0
      %555 = vmatprep.subr.bf16.mxu0 0
      %556 = vmatpush2.bf16.msra.mxu0 0
      %557 = vmatprep.subr.bf16.mxu0 0
      %558 = vmatpush2.bf16.msra.mxu0 0
      %559 = vmatprep.mubr.bf16.mxu0 0
      %560 = vmatmul.mubr.bf16.gmra.mxu0 %v525
      %v561 = vpop.f32.mrf.mxu0
      %v562 = vadd.f32 %v509, %v561
      %v563 = vpop.f32.mrf.mxu0
      %v564 = vpop.f32.mrf.mxu0
      %v565 = vpop.f32.mrf.mxu0
      %566 = vdwg.mxu0
      %v567 = vld [vmem:[%s3] sm:$0xf]
      %v568 = vld [vmem:[%s3 + $0x4] sm:$0xf]
      %v569 = vld [vmem:[%s3 + $0x8] sm:$0xf]
      %v570 = vld [vmem:[%s3 + $0xc] sm:$0xf]
      %v571 = vld [vmem:[%s4] sm:$0x1]
      %v573 = vlaneseq
      %v574 = vshrl.u32 %v573, 7
      %v575 = vsub.s32 0, %v574
      %v576 = vrot.slane %v571, %v575
      %v582 = vunpack.c.l.b16 %v567
      %v583 = vunpack.c.l.b16 %v568
      %v584 = vunpack.c.l.b16 %v569
      %v585 = vunpack.c.l.b16 %v570
      %v586 = vpack.c.b16 %v583, %v582
      %v587 = vpack.c.b16 %v585, %v584
      %590 = vmatprep.subr.bf16.mxu0 0
      %591 = vmatpush1.bf16.msra.mxu0 0
      %592 = vmatprep.subr.bf16.mxu0 0
      %593 = vmatpush1.bf16.msra.mxu0 0
      %594 = vmatprep.subr.bf16.mxu0 0
      %595 = vmatpush1.bf16.msra.mxu0 0
      %596 = vmatprep.subr.bf16.mxu0 0
      %597 = vmatpush1.bf16.msra.mxu0 0
      %598 = vmatprep.subr.bf16.mxu0 0
      %599 = vmatpush1.bf16.msra.mxu0 0
      %600 = vmatprep.subr.bf16.mxu0 0
      %601 = vmatpush1.bf16.msra.mxu0 0
      %602 = vmatprep.subr.bf16.mxu0 0
      %603 = vmatpush1.bf16.msra.mxu0 %v587
      %604 = vmatprep.subr.bf16.mxu0 0
      %605 = vmatpush1.bf16.msra.mxu0 %v586
      %606 = vmatprep.subr.bf16.mxu0 0
      %607 = vmatpush2.bf16.msra.mxu0 0
      %608 = vmatprep.subr.bf16.mxu0 0
      %609 = vmatpush2.bf16.msra.mxu0 0
      %610 = vmatprep.subr.bf16.mxu0 0
      %611 = vmatpush2.bf16.msra.mxu0 0
      %612 = vmatprep.subr.bf16.mxu0 0
      %613 = vmatpush2.bf16.msra.mxu0 0
      %614 = vmatprep.subr.bf16.mxu0 0
      %615 = vmatpush2.bf16.msra.mxu0 0
      %616 = vmatprep.subr.bf16.mxu0 0
      %617 = vmatpush2.bf16.msra.mxu0 0
      %618 = vmatprep.subr.bf16.mxu0 0
      %619 = vmatpush2.bf16.msra.mxu0 0
      %620 = vmatprep.subr.bf16.mxu0 0
      %621 = vmatpush2.bf16.msra.mxu0 0
      %622 = vmatprep.mubr.bf16.mxu0 0
      %623 = vmatmul.mubr.bf16.gmra.mxu0 %v525
      %v624 = vpop.f32.mrf.mxu0
      %v625 = vadd.f32 %v576, %v624
      %v626 = vpop.f32.mrf.mxu0
      %v627 = vpop.f32.mrf.mxu0
      %v628 = vpop.f32.mrf.mxu0
      %629 = vdwg.mxu0
      %v630 = vmul.f32 %v562, 0.5
      %v631 = vmul.f32 %v562, %v562
      %v632 = vmul.f32 %v631, %v562
      %v633 = vmul.f32 %v632, 0.044715
      %v634 = vadd.f32 %v562, %v633
      %v635 = vmul.f32 %v634, 0.7978846
      %v636 = vtanh.pop %v635
      %v637 = vadd.f32 %v636, 1.0
      %v638 = vmul.f32 %v630, %v637
      %v639 = vmul.f32 %v625, 0.5
      %v640 = vmul.f32 %v625, %v625
      %v641 = vmul.f32 %v640, %v625
      %v642 = vmul.f32 %v641, 0.044715
      %v643 = vadd.f32 %v625, %v642
      %v644 = vmul.f32 %v643, 0.7978846
      %v645 = vtanh.pop %v644
      %v646 = vadd.f32 %v645, 1.0
      %v647 = vmul.f32 %v639, %v646
      %v648 = vpack.c.bf16 %v638, %v638
      %v649 = vld [vmem:[%s5] sm:$0xf]
      %v650 = vld [vmem:[%s5 + $0x4] sm:$0xf]
      %v651 = vld [vmem:[%s5 + $0x8] sm:$0xf]
      %v652 = vld [vmem:[%s5 + $0xc] sm:$0xf]
      %v657 = vunpack.c.l.b16 %v649
      %v658 = vunpack.c.l.b16 %v650
      %v659 = vunpack.c.l.b16 %v651
      %v660 = vunpack.c.l.b16 %v652
      %v661 = vpack.c.b16 %v658, %v657
      %v662 = vpack.c.b16 %v660, %v659
      %v666 = vsel %vm523, %v648, 0
      %668 = vmatprep.subr.bf16.mxu0 0
      %669 = vmatpush1.bf16.msra.mxu0 0
      %670 = vmatprep.subr.bf16.mxu0 0
      %671 = vmatpush1.bf16.msra.mxu0 0
      %672 = vmatprep.subr.bf16.mxu0 0
      %673 = vmatpush1.bf16.msra.mxu0 0
      %674 = vmatprep.subr.bf16.mxu0 0
      %675 = vmatpush1.bf16.msra.mxu0 0
      %676 = vmatprep.subr.bf16.mxu0 0
      %677 = vmatpush1.bf16.msra.mxu0 0
      %678 = vmatprep.subr.bf16.mxu0 0
      %679 = vmatpush1.bf16.msra.mxu0 0
      %680 = vmatprep.subr.bf16.mxu0 0
      %681 = vmatpush1.bf16.msra.mxu0 %v662
      %682 = vmatprep.subr.bf16.mxu0 0
      %683 = vmatpush1.bf16.msra.mxu0 %v661
      %684 = vmatprep.subr.bf16.mxu0 0
      %685 = vmatpush2.bf16.msra.mxu0 0
      %686 = vmatprep.subr.bf16.mxu0 0
      %687 = vmatpush2.bf16.msra.mxu0 0
      %688 = vmatprep.subr.bf16.mxu0 0
      %689 = vmatpush2.bf16.msra.mxu0 0
      %690 = vmatprep.subr.bf16.mxu0 0
      %691 = vmatpush2.bf16.msra.mxu0 0
      %692 = vmatprep.subr.bf16.mxu0 0
      %693 = vmatpush2.bf16.msra.mxu0 0
      %694 = vmatprep.subr.bf16.mxu0 0
      %695 = vmatpush2.bf16.msra.mxu0 0
      %696 = vmatprep.subr.bf16.mxu0 0
      %697 = vmatpush2.bf16.msra.mxu0 0
      %698 = vmatprep.subr.bf16.mxu0 0
      %699 = vmatpush2.bf16.msra.mxu0 0
      %700 = vmatprep.mubr.bf16.mxu0 0
      %701 = vmatmul.mubr.bf16.gmra.mxu0 %v666
      %v702 = vpop.f32.mrf.mxu0
      %v703 = vadd.f32 0.0, %v702
      %v704 = vpop.f32.mrf.mxu0
      %v705 = vpop.f32.mrf.mxu0
      %v706 = vpop.f32.mrf.mxu0
      %707 = vdwg.mxu0
      %v708 = vpack.c.bf16 %v703, %v703
      %vm709 = vcmask 257024
      %710 = vst.msk [vmem:[%s475] sm:$0xf] %vm709, %v708
      %v711 = vpack.c.bf16 %v647, %v647
      %712 = vst.msk [vmem:[%s482] sm:$0xf] %vm709, %v711
      %v713 = vld [vmem:[%s6] sm:$0x1]
      %v715 = vlaneseq
      %v716 = vshrl.u32 %v715, 7
      %v717 = vsub.s32 0, %v716
      %v718 = vrot.slane %v713, %v717
      %v720 = vmul.f32 %v638, %v718
      %v721 = vsel %vm523, %v720, 0.0
      %722 = vadd.xlane.f32.xlu0 %v721
      %v723 = vpop.xlane.xlu0 %722
      %v724 = vld [vmem:[#allocation2] sm:$0x1]
      %v726 = vlaneseq
      %v727 = vshrl.u32 %v726, 7
      %v728 = vsub.s32 0, %v727
      %v729 = vrot.slane %v724, %v728
      %v731 = vadd.f32 %v723, %v729
      %vm732 = vcmask 7168
      %733 = vst.msk [vmem:[%s489] sm:$0xff] %vm732, %v731
      %v734 = vld [vmem:[%s7] sm:$0x1]
      %v736 = vlaneseq
      %v737 = vshrl.u32 %v736, 7
      %v738 = vsub.s32 0, %v737
      %v739 = vrot.slane %v734, %v738
      %v741 = vmul.f32 %v647, %v739
      %v742 = vsel %vm523, %v741, 0.0
      %743 = vadd.xlane.f32.xlu0 %v742
      %v744 = vpop.xlane.xlu0 %743
      %745 = vst.msk [vmem:[%s496] sm:$0xff] %vm732, %v744
      %p746 = scmp.lt.s32.totalorder %s30, 1
      %s747 = scalar_select %p746, %s30, 1
      %p748 = scmp.lt.s32.totalorder %s31, 0
      %s749 = scalar_select %p748, %s31, 0
      %s750 = sadd.s32 %s749, %s747
      %s751 = smul.addr %s750, 4
      %s752 = scalar_lea.vmem %s9, %s751
      %p753 = scmp.lt.s32.totalorder %s30, 1
      %s754 = scalar_select %p753, %s30, 1
      %p755 = scmp.lt.s32.totalorder %s31, 0
      %s756 = scalar_select %p755, %s31, 0
      %s757 = sadd.s32 %s756, %s754
      %s758 = smul.addr %s757, 4
      %s759 = scalar_lea.vmem %s10, %s758
      %p760 = scmp.lt.s32.totalorder %s30, 1
      %s761 = scalar_select %p760, %s30, 1
      %p762 = scmp.lt.s32.totalorder %s31, 0
      %s763 = scalar_select %p762, %s31, 0
      %s764 = sadd.s32 %s763, %s761
      %s765 = smul.addr %s764, 8
      %s766 = scalar_lea.vmem %s11, %s765
      %p767 = scmp.lt.s32.totalorder %s30, 1
      %s768 = scalar_select %p767, %s30, 1
      %p769 = scmp.lt.s32.totalorder %s31, 0
      %s770 = scalar_select %p769, %s31, 0
      %s771 = sadd.s32 %s770, %s768
      %s772 = smul.addr %s771, 8
      %s773 = scalar_lea.vmem %s12, %s772
      // Predicated region
      $region57: #{span_classifier_fwd.2} parent=55 // pred_check
        %p774 = pneg %p254
      $region58: #{span_classifier_fwd.2} parent=55 // pred_check_branch
        %776 = sbr.rel (%p774) target = $region60
      $region59: #{span_classifier_fwd.2} parent=55 // pred_region
        _
      $region60: #{span_classifier_fwd.2} parent=55 // pred_fallthru
        _
      // Predicated region
      $region61: #{span_classifier_fwd.2} parent=55 // pred_check
        %p777 = pneg %p282
      $region62: #{span_classifier_fwd.2} parent=55 // pred_check_branch
        %779 = sbr.rel (%p777) target = $region64
      $region63: #{span_classifier_fwd.2} parent=55 // pred_region
        _
      $region64: #{span_classifier_fwd.2} parent=55 // pred_fallthru
        _
      // Predicated region
      $region65: #{span_classifier_fwd.2} parent=55 // pred_check
        %p780 = pneg %p310
      $region66: #{span_classifier_fwd.2} parent=55 // pred_check_branch
        %782 = sbr.rel (%p780) target = $region68
      $region67: #{span_classifier_fwd.2} parent=55 // pred_region
        _
      $region68: #{span_classifier_fwd.2} parent=55 // pred_fallthru
        _
      // Predicated region
      $region69: #{span_classifier_fwd.2} parent=55 // pred_check
        %p783 = pneg %p338
      $region70: #{span_classifier_fwd.2} parent=55 // pred_check_branch
        %785 = sbr.rel (%p783) target = $region72
      $region71: #{span_classifier_fwd.2} parent=55 // pred_region
        _
      $region72: #{span_classifier_fwd.2} parent=55 // pred_fallthru
        _
    $region56: #{span_classifier_fwd.2} parent=5 // pred_fallthru
      _
    %p786 = scmp.le.s32.totalorder 2, %s21
    // Predicated region
    $region73: #{span_classifier_fwd.2} parent=5 // pred_check
      %p787 = pneg %p786
    $region74: #{span_classifier_fwd.2} parent=5 // pred_check_branch
      %789 = sbr.rel (%p787) target = $region76
    $region75: #{span_classifier_fwd.2} parent=5 // pred_region
      %s790 = ssub.s32 %s21, 2
      // Predicated region
      $region77: #{span_classifier_fwd.2} parent=75 // pred_check
        %p791 = pneg %p260
      $region78: #{span_classifier_fwd.2} parent=75 // pred_check_branch
        %793 = sbr.rel (%p791) target = $region80
      $region79: #{span_classifier_fwd.2} parent=75 // pred_region
        %p794 = scmp.lt.s32.totalorder %s32, 1
        %s795 = scalar_select %p794, %s32, 1
        %p796 = scmp.lt.s32.totalorder %s33, 0
        %s797 = scalar_select %p796, %s33, 0
        %s798 = sadd.s32 %s797, %s795
        %s799 = smul.addr %s798, 4
        %s800 = scalar_lea.vmem %s9, %s799
      $region80: #{span_classifier_fwd.2} parent=75 // pred_fallthru
        _
      // Predicated region
      $region81: #{span_classifier_fwd.2} parent=75 // pred_check
        %p801 = pneg %p288
      $region82: #{span_classifier_fwd.2} parent=75 // pred_check_branch
        %803 = sbr.rel (%p801) target = $region84
      $region83: #{span_classifier_fwd.2} parent=75 // pred_region
        %p804 = scmp.lt.s32.totalorder %s32, 1
        %s805 = scalar_select %p804, %s32, 1
        %p806 = scmp.lt.s32.totalorder %s33, 0
        %s807 = scalar_select %p806, %s33, 0
        %s808 = sadd.s32 %s807, %s805
        %s809 = smul.addr %s808, 4
        %s810 = scalar_lea.vmem %s10, %s809
      $region84: #{span_classifier_fwd.2} parent=75 // pred_fallthru
        _
      // Predicated region
      $region85: #{span_classifier_fwd.2} parent=75 // pred_check
        %p811 = pneg %p316
      $region86: #{span_classifier_fwd.2} parent=75 // pred_check_branch
        %813 = sbr.rel (%p811) target = $region88
      $region87: #{span_classifier_fwd.2} parent=75 // pred_region
        %p814 = scmp.lt.s32.totalorder %s32, 1
        %s815 = scalar_select %p814, %s32, 1
        %p816 = scmp.lt.s32.totalorder %s33, 0
        %s817 = scalar_select %p816, %s33, 0
        %s818 = sadd.s32 %s817, %s815
        %s819 = smul.addr %s818, 8
        %s820 = scalar_lea.vmem %s11, %s819
      $region88: #{span_classifier_fwd.2} parent=75 // pred_fallthru
        _
      // Predicated region
      $region89: #{span_classifier_fwd.2} parent=75 // pred_check
        %p821 = pneg %p344
      $region90: #{span_classifier_fwd.2} parent=75 // pred_check_branch
        %823 = sbr.rel (%p821) target = $region92
      $region91: #{span_classifier_fwd.2} parent=75 // pred_region
        %p824 = scmp.lt.s32.totalorder %s32, 1
        %s825 = scalar_select %p824, %s32, 1
        %p826 = scmp.lt.s32.totalorder %s33, 0
        %s827 = scalar_select %p826, %s33, 0
        %s828 = sadd.s32 %s827, %s825
        %s829 = smul.addr %s828, 8
        %s830 = scalar_lea.vmem %s12, %s829
      $region92: #{span_classifier_fwd.2} parent=75 // pred_fallthru
        _
    $region76: #{span_classifier_fwd.2} parent=5 // pred_fallthru
      _
  $region6: #{span_classifier_fwd.2} parent=0 // loop_footer
    %s25 = sadd.s32 1, %s21
  $region7: #{span_classifier_fwd.2} parent=0 // loop_footer_branch
    %20 = sbr.rel target = $region3
  $region8: #{span_classifier_fwd.2} parent=0 // loop_exit
    _

</llo_original>
